<compile_context>
chip_gen: v7x
topology: tpu7x:2x2x1
jax: 0.10.0
libtpu: 0.0.40
codegen_flags: <defaults>
</compile_context>

<pallas_src>
import functools

import jax
import jax.numpy as jnp
from jax import lax
from jax.experimental import pallas as pl
from jax.experimental.pallas import tpu as pltpu


# ----------------------------- fused kernel --------------------------------

def _fused_mha_kernel(x_ref, w_in_ref, b_in_ref, w_out_ref, b_out_ref, o_ref,
                      *, n_heads, scale):
    """Single invocation handles the full (L, N, E) problem.

    x_ref     : (L, N, E)   input (seq, batch, dim) — resident in VMEM
    w_in_ref  : (E, 3E)     packed in-projection weight (pre-transposed)
    b_in_ref  : (1, 3E)
    w_out_ref : (E, E)      out-projection weight (pre-transposed)
    b_out_ref : (1, E)
    o_ref     : (L, N, E)
    """
    L, N, E = x_ref.shape
    H = n_heads
    Dh = E // H

    x = x_ref[...]                                          # (L, N, E)

    # Batch-major (N*L, E) slab so each (batch, head) block is a contiguous
    # sublane range.  Built from N static middle-dim slices + one sublane-axis
    # concatenate (avoids an in-kernel (L, N, E) -> (N*L, E) relayout reshape).
    x2d = jnp.concatenate([x[:, n, :] for n in range(N)], axis=0)   # (N*L, E)

    # Fused in-projection: ONE lane-dense GEMM at M = N*L.
    qkv = jnp.dot(x2d, w_in_ref[...], preferred_element_type=jnp.float32)
    qkv = qkv + b_in_ref[...]                               # (N*L, 3E)

    q = qkv[:, 0 * E:1 * E] * scale
    k = qkv[:, 1 * E:2 * E]
    v = qkv[:, 2 * E:3 * E]

    def blk(t, n, h):
        # (L, Dh) block for batch n, head h — static sublane/lane slices.
        return t[n * L:(n + 1) * L, h * Dh:(h + 1) * Dh]

    # Scores for every (batch, head) pair; contraction on the last dims of both
    # operands (no k.T / XLU transpose).  Stacked along the sublane axis so the
    # softmax below runs once over the whole problem.
    s_blocks = [
        lax.dot_general(blk(q, n, h), blk(k, n, h),
                        (((1,), (1,)), ((), ())),
                        preferred_element_type=jnp.float32)          # (L, L)
        for n in range(N) for h in range(H)
    ]
    s = jnp.concatenate(s_blocks, axis=0)                   # (N*H*L, L)

    # Numerically-stable softmax, done ONCE for all batches/heads.
    m = jnp.max(s, axis=-1, keepdims=True)
    p = jnp.exp(s - m)
    denom = jnp.sum(p, axis=-1, keepdims=True)
    p = p / denom                                           # exact normalization

    # PV per (batch, head); contexts stay in registers and are merged with
    # concatenates — no VMEM scratch, no masked Dh-wide stores, no reload.
    ctx_rows = []
    for n in range(N):
        head_ctx = [
            jnp.dot(p[(n * H + h) * L:(n * H + h + 1) * L, :], blk(v, n, h),
                    preferred_element_type=jnp.float32)              # (L, Dh)
            for h in range(H)
        ]
        ctx_rows.append(jnp.concatenate(head_ctx, axis=-1))          # (L, E)
    ctx = jnp.concatenate(ctx_rows, axis=0)                 # (N*L, E)

    # Fused out-projection: ONE lane-dense GEMM at M = N*L.
    out = jnp.dot(ctx, w_out_ref[...], preferred_element_type=jnp.float32)
    out = out + b_out_ref[...]                              # (N*L, E)

    # Write directly in (L, N, E) layout — no wrapper-side output transpose.
    for n in range(N):
        o_ref[:, n, :] = out[n * L:(n + 1) * L, :].astype(o_ref.dtype)


# ----------------------------- wrappers ------------------------------------

def prepare_attention_params(params):
    """One-time host-side prep: pre-transpose / reshape the MHA weights so the
    kernel contracts on the natural (last-dim x first-dim) MXU layout every
    forward call (no per-call .T transposes)."""
    E = params["out_proj_w"].shape[0]
    return {
        "w_in": jnp.asarray(params["in_proj_w"]).T,           # (E, 3E)
        "b_in": jnp.asarray(params["in_proj_b"]).reshape(1, 3 * E),
        "w_out": jnp.asarray(params["out_proj_w"]).T,         # (E, E)
        "b_out": jnp.asarray(params["out_proj_b"]).reshape(1, E),
    }


def attention_forward(x, prepped, n_heads):
    """x: (L, N, E) float32. Returns attn_output: (L, N, E).

    Single fused pallas_call, single grid step: in-proj GEMM -> per-head
    attention with one stacked softmax -> out-proj GEMM, all in VMEM.  The
    unused q/k/v nn.Linear layers of the module do not contribute to
    attn_output and are therefore not computed (dead work elided).
    """
    L, N, E = x.shape
    H = n_heads
    Dh = E // H
    scale = 1.0 / (Dh ** 0.5)

    kernel = functools.partial(_fused_mha_kernel, n_heads=n_heads, scale=scale)

    M = N * L
    flops = (2 * M * E * (3 * E)             # in-projection
             + 4 * N * H * L * L * Dh        # QK^T + PV
             + 2 * M * E * E)                # out-projection
    transcendentals = N * H * L * L          # exp in the softmax
    bytes_accessed = 4 * (2 * M * E + E * 3 * E + 3 * E + E * E + E)

    vmem = pl.BlockSpec(memory_space=pltpu.MemorySpace.VMEM)

    return pl.pallas_call(
        kernel,
        out_shape=jax.ShapeDtypeStruct((L, N, E), x.dtype),
        in_specs=[vmem, vmem, vmem, vmem, vmem],   # whole arrays resident in VMEM
        out_specs=vmem,
        cost_estimate=pl.CostEstimate(flops=flops,
                                      transcendentals=transcendentals,
                                      bytes_accessed=bytes_accessed),
    )(x, prepped["w_in"], prepped["b_in"], prepped["w_out"], prepped["b_out"])


# ----------------------------- reference (pure JAX) -------------------------

def attention_reference(x, params, n_heads):
    L, N, E = x.shape
    Dh = E // n_heads
    scale = 1.0 / (Dh ** 0.5)
    qkv = x @ params["in_proj_w"].T + params["in_proj_b"]
    q, k, v = jnp.split(qkv, 3, axis=-1)

    def sh(t):
        return jnp.transpose(t.reshape(L, N, n_heads, Dh), (1, 2, 0, 3))

    qh, kh, vh = sh(q), sh(k), sh(v)
    s = jnp.einsum("nhld,nhmd->nhlm", qh * scale, kh)
    p = jax.nn.softmax(s, axis=-1)
    ctx = jnp.einsum("nhlm,nhmd->nhld", p, vh)
    ctx = jnp.transpose(ctx, (2, 0, 1, 3)).reshape(L, N, E)
    return ctx @ params["out_proj_w"].T + params["out_proj_b"]


# ----------------------------- main ------------------------------------------

if __name__ == "__main__":
    dim, n_heads, seq, batch = 32, 4, 8, 2

    key = jax.random.PRNGKey(0)
    ks = jax.random.split(key, 12)
    sc = 0.05
    params = {
        # nn.Linear q/k/v — present in the module but their outputs are unused,
        # so attention_forward never computes them (dead work elided).
        "wq": sc * jax.random.normal(ks[0], (dim, dim), jnp.float32),
        "bq": sc * jax.random.normal(ks[1], (dim,), jnp.float32),
        "wk": sc * jax.random.normal(ks[2], (dim, dim), jnp.float32),
        "bk": sc * jax.random.normal(ks[3], (dim,), jnp.float32),
        "wv": sc * jax.random.normal(ks[4], (dim, dim), jnp.float32),
        "bv": sc * jax.random.normal(ks[5], (dim,), jnp.float32),
        # nn.MultiheadAttention packed in-proj (3*dim, dim) and out-proj (dim, dim)
        "in_proj_w": sc * jax.random.normal(ks[6], (3 * dim, dim), jnp.float32),
        "in_proj_b": sc * jax.random.normal(ks[7], (3 * dim,), jnp.float32),
        "out_proj_w": sc * jax.random.normal(ks[8], (dim, dim), jnp.float32),
        "out_proj_b": sc * jax.random.normal(ks[9], (dim,), jnp.float32),
    }

    # layout: (seq, batch, dim) = (L, N, E), PyTorch MHA default (batch_first=False)
    x = jax.random.normal(ks[10], (seq, batch, dim), jnp.float32)

    prepped = prepare_attention_params(params)   # one-time weight prep
    out = attention_forward(x, prepped, n_heads)
    out = jax.block_until_ready(out)

    ref = attention_reference(x, params, n_heads)
    assert out.shape == (seq, batch, dim)
    assert jnp.allclose(out, ref, atol=1e-4, rtol=1e-4), (
        float(jnp.max(jnp.abs(out - ref))))

    print("KERNEL_OK")
</pallas_src>

<mosaic_0001>
module attributes {stable_mosaic.version = 11 : i64} {
  func.func @_fused_mha_kernel(%arg0: memref<8x2x32xf32, #tpu.memory_space<vmem>>, %arg1: memref<32x96xf32, #tpu.memory_space<vmem>>, %arg2: memref<1x96xf32, #tpu.memory_space<vmem>>, %arg3: memref<32x32xf32, #tpu.memory_space<vmem>>, %arg4: memref<1x32xf32, #tpu.memory_space<vmem>>, %arg5: memref<8x2x32xf32, #tpu.memory_space<vmem>>) attributes {dimension_semantics = [], scalar_prefetch = 0 : i64, scratch_operands = 0 : i64, tpu.core_type = #tpu.core_type<tc>} {
    %c0 = arith.constant 0 : index
    %c0_0 = arith.constant 0 : index
    %c0_1 = arith.constant 0 : index
    %0 = vector.load %arg0[%c0, %c0_0, %c0_1] : memref<8x2x32xf32, #tpu.memory_space<vmem>>, vector<8x2x32xf32>
    %1 = vector.extract_strided_slice %0 {offsets = [0, 0, 0], sizes = [8, 1, 32], strides = [1, 1, 1]} : vector<8x2x32xf32> to vector<8x1x32xf32>
    %2 = vector.shape_cast %1 : vector<8x1x32xf32> to vector<8x32xf32>
    %3 = vector.extract_strided_slice %0 {offsets = [0, 1, 0], sizes = [8, 1, 32], strides = [1, 1, 1]} : vector<8x2x32xf32> to vector<8x1x32xf32>
    %4 = vector.shape_cast %3 : vector<8x1x32xf32> to vector<8x32xf32>
    %5 = tpu.concatenate %2, %4 in 0 : vector<8x32xf32>, vector<8x32xf32> -> vector<16x32xf32>
    %c0_2 = arith.constant 0 : index
    %c0_3 = arith.constant 0 : index
    %6 = vector.load %arg1[%c0_2, %c0_3] : memref<32x96xf32, #tpu.memory_space<vmem>>, vector<32x96xf32>
    %cst = arith.constant dense<0.000000e+00> : vector<16x96xf32>
    %7 = tpu.matmul %5, %6, %cst {dimension_numbers = #tpu.dot_dimension_numbers<[1], [0], [0], [1], [0, 0, 1, 1], [], []>} : vector<16x32xf32>, vector<32x96xf32>, vector<16x96xf32> -> vector<16x96xf32>
    %c0_4 = arith.constant 0 : index
    %c0_5 = arith.constant 0 : index
    %8 = vector.load %arg2[%c0_4, %c0_5] : memref<1x96xf32, #tpu.memory_space<vmem>>, vector<1x96xf32>
    %9 = vector.broadcast %8 : vector<1x96xf32> to vector<16x96xf32>
    %10 = arith.addf %7, %9 : vector<16x96xf32>
    %11 = vector.extract_strided_slice %10 {offsets = [0, 0], sizes = [16, 32], strides = [1, 1]} : vector<16x96xf32> to vector<16x32xf32>
    %cst_6 = arith.constant 0.353553385 : f32
    %12 = vector.broadcast %cst_6 : f32 to vector<16x32xf32>
    %13 = arith.mulf %11, %12 : vector<16x32xf32>
    %14 = vector.extract_strided_slice %10 {offsets = [0, 32], sizes = [16, 32], strides = [1, 1]} : vector<16x96xf32> to vector<16x32xf32>
    %15 = vector.extract_strided_slice %10 {offsets = [0, 64], sizes = [16, 32], strides = [1, 1]} : vector<16x96xf32> to vector<16x32xf32>
    %16 = vector.extract_strided_slice %13 {offsets = [0, 0], sizes = [8, 8], strides = [1, 1]} : vector<16x32xf32> to vector<8x8xf32>
    %17 = vector.extract_strided_slice %14 {offsets = [0, 0], sizes = [8, 8], strides = [1, 1]} : vector<16x32xf32> to vector<8x8xf32>
    %cst_7 = arith.constant dense<0.000000e+00> : vector<8x8xf32>
    %18 = tpu.matmul %16, %17, %cst_7 {dimension_numbers = #tpu.dot_dimension_numbers<[1], [1], [0], [0], [0, 0, 1, 0], [], []>} : vector<8x8xf32>, vector<8x8xf32>, vector<8x8xf32> -> vector<8x8xf32>
    %19 = vector.extract_strided_slice %13 {offsets = [0, 8], sizes = [8, 8], strides = [1, 1]} : vector<16x32xf32> to vector<8x8xf32>
    %20 = vector.extract_strided_slice %14 {offsets = [0, 8], sizes = [8, 8], strides = [1, 1]} : vector<16x32xf32> to vector<8x8xf32>
    %cst_8 = arith.constant dense<0.000000e+00> : vector<8x8xf32>
    %21 = tpu.matmul %19, %20, %cst_8 {dimension_numbers = #tpu.dot_dimension_numbers<[1], [1], [0], [0], [0, 0, 1, 0], [], []>} : vector<8x8xf32>, vector<8x8xf32>, vector<8x8xf32> -> vector<8x8xf32>
    %22 = vector.extract_strided_slice %13 {offsets = [0, 16], sizes = [8, 8], strides = [1, 1]} : vector<16x32xf32> to vector<8x8xf32>
    %23 = vector.extract_strided_slice %14 {offsets = [0, 16], sizes = [8, 8], strides = [1, 1]} : vector<16x32xf32> to vector<8x8xf32>
    %cst_9 = arith.constant dense<0.000000e+00> : vector<8x8xf32>
    %24 = tpu.matmul %22, %23, %cst_9 {dimension_numbers = #tpu.dot_dimension_numbers<[1], [1], [0], [0], [0, 0, 1, 0], [], []>} : vector<8x8xf32>, vector<8x8xf32>, vector<8x8xf32> -> vector<8x8xf32>
    %25 = vector.extract_strided_slice %13 {offsets = [0, 24], sizes = [8, 8], strides = [1, 1]} : vector<16x32xf32> to vector<8x8xf32>
    %26 = vector.extract_strided_slice %14 {offsets = [0, 24], sizes = [8, 8], strides = [1, 1]} : vector<16x32xf32> to vector<8x8xf32>
    %cst_10 = arith.constant dense<0.000000e+00> : vector<8x8xf32>
    %27 = tpu.matmul %25, %26, %cst_10 {dimension_numbers = #tpu.dot_dimension_numbers<[1], [1], [0], [0], [0, 0, 1, 0], [], []>} : vector<8x8xf32>, vector<8x8xf32>, vector<8x8xf32> -> vector<8x8xf32>
    %28 = vector.extract_strided_slice %13 {offsets = [8, 0], sizes = [8, 8], strides = [1, 1]} : vector<16x32xf32> to vector<8x8xf32>
    %29 = vector.extract_strided_slice %14 {offsets = [8, 0], sizes = [8, 8], strides = [1, 1]} : vector<16x32xf32> to vector<8x8xf32>
    %cst_11 = arith.constant dense<0.000000e+00> : vector<8x8xf32>
    %30 = tpu.matmul %28, %29, %cst_11 {dimension_numbers = #tpu.dot_dimension_numbers<[1], [1], [0], [0], [0, 0, 1, 0], [], []>} : vector<8x8xf32>, vector<8x8xf32>, vector<8x8xf32> -> vector<8x8xf32>
    %31 = vector.extract_strided_slice %13 {offsets = [8, 8], sizes = [8, 8], strides = [1, 1]} : vector<16x32xf32> to vector<8x8xf32>
    %32 = vector.extract_strided_slice %14 {offsets = [8, 8], sizes = [8, 8], strides = [1, 1]} : vector<16x32xf32> to vector<8x8xf32>
    %cst_12 = arith.constant dense<0.000000e+00> : vector<8x8xf32>
    %33 = tpu.matmul %31, %32, %cst_12 {dimension_numbers = #tpu.dot_dimension_numbers<[1], [1], [0], [0], [0, 0, 1, 0], [], []>} : vector<8x8xf32>, vector<8x8xf32>, vector<8x8xf32> -> vector<8x8xf32>
    %34 = vector.extract_strided_slice %13 {offsets = [8, 16], sizes = [8, 8], strides = [1, 1]} : vector<16x32xf32> to vector<8x8xf32>
    %35 = vector.extract_strided_slice %14 {offsets = [8, 16], sizes = [8, 8], strides = [1, 1]} : vector<16x32xf32> to vector<8x8xf32>
    %cst_13 = arith.constant dense<0.000000e+00> : vector<8x8xf32>
    %36 = tpu.matmul %34, %35, %cst_13 {dimension_numbers = #tpu.dot_dimension_numbers<[1], [1], [0], [0], [0, 0, 1, 0], [], []>} : vector<8x8xf32>, vector<8x8xf32>, vector<8x8xf32> -> vector<8x8xf32>
    %37 = vector.extract_strided_slice %13 {offsets = [8, 24], sizes = [8, 8], strides = [1, 1]} : vector<16x32xf32> to vector<8x8xf32>
    %38 = vector.extract_strided_slice %14 {offsets = [8, 24], sizes = [8, 8], strides = [1, 1]} : vector<16x32xf32> to vector<8x8xf32>
    %cst_14 = arith.constant dense<0.000000e+00> : vector<8x8xf32>
    %39 = tpu.matmul %37, %38, %cst_14 {dimension_numbers = #tpu.dot_dimension_numbers<[1], [1], [0], [0], [0, 0, 1, 0], [], []>} : vector<8x8xf32>, vector<8x8xf32>, vector<8x8xf32> -> vector<8x8xf32>
    %40 = tpu.concatenate %18, %21, %24, %27, %30, %33, %36, %39 in 0 : vector<8x8xf32>, vector<8x8xf32>, vector<8x8xf32>, vector<8x8xf32>, vector<8x8xf32>, vector<8x8xf32>, vector<8x8xf32>, vector<8x8xf32> -> vector<64x8xf32>
    %cst_15 = arith.constant dense<0xFF800000> : vector<64xf32>
    %41 = vector.multi_reduction <maximumf>, %40, %cst_15 [1] : vector<64x8xf32> to vector<64xf32>
    %42 = vector.shape_cast %41 : vector<64xf32> to vector<64x1xf32>
    %43 = vector.broadcast %42 : vector<64x1xf32> to vector<64x8xf32>
    %44 = arith.subf %40, %43 : vector<64x8xf32>
    %45 = math.exp %44 : vector<64x8xf32>
    %cst_16 = arith.constant dense<0.000000e+00> : vector<64xf32>
    %46 = vector.multi_reduction <add>, %45, %cst_16 [1] : vector<64x8xf32> to vector<64xf32>
    %47 = vector.shape_cast %46 : vector<64xf32> to vector<64x1xf32>
    %48 = vector.broadcast %47 : vector<64x1xf32> to vector<64x8xf32>
    %49 = arith.divf %45, %48 : vector<64x8xf32>
    %50 = vector.extract_strided_slice %49 {offsets = [0, 0], sizes = [8, 8], strides = [1, 1]} : vector<64x8xf32> to vector<8x8xf32>
    %51 = vector.extract_strided_slice %15 {offsets = [0, 0], sizes = [8, 8], strides = [1, 1]} : vector<16x32xf32> to vector<8x8xf32>
    %cst_17 = arith.constant dense<0.000000e+00> : vector<8x8xf32>
    %52 = tpu.matmul %50, %51, %cst_17 {dimension_numbers = #tpu.dot_dimension_numbers<[1], [0], [0], [1], [0, 0, 1, 1], [], []>} : vector<8x8xf32>, vector<8x8xf32>, vector<8x8xf32> -> vector<8x8xf32>
    %53 = vector.extract_strided_slice %49 {offsets = [8, 0], sizes = [8, 8], strides = [1, 1]} : vector<64x8xf32> to vector<8x8xf32>
    %54 = vector.extract_strided_slice %15 {offsets = [0, 8], sizes = [8, 8], strides = [1, 1]} : vector<16x32xf32> to vector<8x8xf32>
    %cst_18 = arith.constant dense<0.000000e+00> : vector<8x8xf32>
    %55 = tpu.matmul %53, %54, %cst_18 {dimension_numbers = #tpu.dot_dimension_numbers<[1], [0], [0], [1], [0, 0, 1, 1], [], []>} : vector<8x8xf32>, vector<8x8xf32>, vector<8x8xf32> -> vector<8x8xf32>
    %56 = vector.extract_strided_slice %49 {offsets = [16, 0], sizes = [8, 8], strides = [1, 1]} : vector<64x8xf32> to vector<8x8xf32>
    %57 = vector.extract_strided_slice %15 {offsets = [0, 16], sizes = [8, 8], strides = [1, 1]} : vector<16x32xf32> to vector<8x8xf32>
    %cst_19 = arith.constant dense<0.000000e+00> : vector<8x8xf32>
    %58 = tpu.matmul %56, %57, %cst_19 {dimension_numbers = #tpu.dot_dimension_numbers<[1], [0], [0], [1], [0, 0, 1, 1], [], []>} : vector<8x8xf32>, vector<8x8xf32>, vector<8x8xf32> -> vector<8x8xf32>
    %59 = vector.extract_strided_slice %49 {offsets = [24, 0], sizes = [8, 8], strides = [1, 1]} : vector<64x8xf32> to vector<8x8xf32>
    %60 = vector.extract_strided_slice %15 {offsets = [0, 24], sizes = [8, 8], strides = [1, 1]} : vector<16x32xf32> to vector<8x8xf32>
    %cst_20 = arith.constant dense<0.000000e+00> : vector<8x8xf32>
    %61 = tpu.matmul %59, %60, %cst_20 {dimension_numbers = #tpu.dot_dimension_numbers<[1], [0], [0], [1], [0, 0, 1, 1], [], []>} : vector<8x8xf32>, vector<8x8xf32>, vector<8x8xf32> -> vector<8x8xf32>
    %62 = tpu.concatenate %52, %55, %58, %61 in 1 : vector<8x8xf32>, vector<8x8xf32>, vector<8x8xf32>, vector<8x8xf32> -> vector<8x32xf32>
    %63 = vector.extract_strided_slice %49 {offsets = [32, 0], sizes = [8, 8], strides = [1, 1]} : vector<64x8xf32> to vector<8x8xf32>
    %64 = vector.extract_strided_slice %15 {offsets = [8, 0], sizes = [8, 8], strides = [1, 1]} : vector<16x32xf32> to vector<8x8xf32>
    %cst_21 = arith.constant dense<0.000000e+00> : vector<8x8xf32>
    %65 = tpu.matmul %63, %64, %cst_21 {dimension_numbers = #tpu.dot_dimension_numbers<[1], [0], [0], [1], [0, 0, 1, 1], [], []>} : vector<8x8xf32>, vector<8x8xf32>, vector<8x8xf32> -> vector<8x8xf32>
    %66 = vector.extract_strided_slice %49 {offsets = [40, 0], sizes = [8, 8], strides = [1, 1]} : vector<64x8xf32> to vector<8x8xf32>
    %67 = vector.extract_strided_slice %15 {offsets = [8, 8], sizes = [8, 8], strides = [1, 1]} : vector<16x32xf32> to vector<8x8xf32>
    %cst_22 = arith.constant dense<0.000000e+00> : vector<8x8xf32>
    %68 = tpu.matmul %66, %67, %cst_22 {dimension_numbers = #tpu.dot_dimension_numbers<[1], [0], [0], [1], [0, 0, 1, 1], [], []>} : vector<8x8xf32>, vector<8x8xf32>, vector<8x8xf32> -> vector<8x8xf32>
    %69 = vector.extract_strided_slice %49 {offsets = [48, 0], sizes = [8, 8], strides = [1, 1]} : vector<64x8xf32> to vector<8x8xf32>
    %70 = vector.extract_strided_slice %15 {offsets = [8, 16], sizes = [8, 8], strides = [1, 1]} : vector<16x32xf32> to vector<8x8xf32>
    %cst_23 = arith.constant dense<0.000000e+00> : vector<8x8xf32>
    %71 = tpu.matmul %69, %70, %cst_23 {dimension_numbers = #tpu.dot_dimension_numbers<[1], [0], [0], [1], [0, 0, 1, 1], [], []>} : vector<8x8xf32>, vector<8x8xf32>, vector<8x8xf32> -> vector<8x8xf32>
    %72 = vector.extract_strided_slice %49 {offsets = [56, 0], sizes = [8, 8], strides = [1, 1]} : vector<64x8xf32> to vector<8x8xf32>
    %73 = vector.extract_strided_slice %15 {offsets = [8, 24], sizes = [8, 8], strides = [1, 1]} : vector<16x32xf32> to vector<8x8xf32>
    %cst_24 = arith.constant dense<0.000000e+00> : vector<8x8xf32>
    %74 = tpu.matmul %72, %73, %cst_24 {dimension_numbers = #tpu.dot_dimension_numbers<[1], [0], [0], [1], [0, 0, 1, 1], [], []>} : vector<8x8xf32>, vector<8x8xf32>, vector<8x8xf32> -> vector<8x8xf32>
    %75 = tpu.concatenate %65, %68, %71, %74 in 1 : vector<8x8xf32>, vector<8x8xf32>, vector<8x8xf32>, vector<8x8xf32> -> vector<8x32xf32>
    %76 = tpu.concatenate %62, %75 in 0 : vector<8x32xf32>, vector<8x32xf32> -> vector<16x32xf32>
    %c0_25 = arith.constant 0 : index
    %c0_26 = arith.constant 0 : index
    %77 = vector.load %arg3[%c0_25, %c0_26] : memref<32x32xf32, #tpu.memory_space<vmem>>, vector<32x32xf32>
    %cst_27 = arith.constant dense<0.000000e+00> : vector<16x32xf32>
    %78 = tpu.matmul %76, %77, %cst_27 {dimension_numbers = #tpu.dot_dimension_numbers<[1], [0], [0], [1], [0, 0, 1, 1], [], []>} : vector<16x32xf32>, vector<32x32xf32>, vector<16x32xf32> -> vector<16x32xf32>
    %c0_28 = arith.constant 0 : index
    %c0_29 = arith.constant 0 : index
    %79 = vector.load %arg4[%c0_28, %c0_29] : memref<1x32xf32, #tpu.memory_space<vmem>>, vector<1x32xf32>
    %80 = vector.broadcast %79 : vector<1x32xf32> to vector<16x32xf32>
    %81 = arith.addf %78, %80 : vector<16x32xf32>
    %82 = vector.extract_strided_slice %81 {offsets = [0, 0], sizes = [8, 32], strides = [1, 1]} : vector<16x32xf32> to vector<8x32xf32>
    %c0_30 = arith.constant 0 : index
    %c0_31 = arith.constant 0 : index
    %c0_32 = arith.constant 0 : index
    %83 = vector.load %arg5[%c0_30, %c0_31, %c0_32] : memref<8x2x32xf32, #tpu.memory_space<vmem>>, vector<8x1x32xf32>
    %84 = vector.shape_cast %83 : vector<8x1x32xf32> to vector<8x32xf32>
    %85 = vector.shape_cast %82 : vector<8x32xf32> to vector<8x1x32xf32>
    tpu.vector_store %arg5[%c0_30, %c0_31, %c0_32], %85 {strides = array<i32>} : memref<8x2x32xf32, #tpu.memory_space<vmem>>, vector<8x1x32xf32>,
    %86 = vector.extract_strided_slice %81 {offsets = [8, 0], sizes = [8, 32], strides = [1, 1]} : vector<16x32xf32> to vector<8x32xf32>
    %c0_33 = arith.constant 0 : index
    %c1 = arith.constant 1 : index
    %c0_34 = arith.constant 0 : index
    %87 = vector.load %arg5[%c0_33, %c1, %c0_34] : memref<8x2x32xf32, #tpu.memory_space<vmem>>, vector<8x1x32xf32>
    %88 = vector.shape_cast %87 : vector<8x1x32xf32> to vector<8x32xf32>
    %89 = vector.shape_cast %86 : vector<8x32xf32> to vector<8x1x32xf32>
    tpu.vector_store %arg5[%c0_33, %c1, %c0_34], %89 {strides = array<i32>} : memref<8x2x32xf32, #tpu.memory_space<vmem>>, vector<8x1x32xf32>,
    return
  }
}

</mosaic_0001>

<llo_original>
// kernel: tpu_custom_call.1
$region0: #{tpu_custom_call.1}
  #allocation0 [shape = 'u32[]', space=smem, size = 0x4, offset = 0x4, fixed_abs, tag = 'smem constant byte address 0x4 - core index']
  #allocation1 [shape = 'u32[144,128]{1,0:T(1,128)}', space=vmem, size = 0x12000, scoped, tag = 'internal scratch']
  %s0 = inlined_call_operand.hbm [shape: f32[8,2,32], index: 0, kind: input, shape index: {}]
  %s1 = inlined_call_operand.hbm [shape: f32[32,96], index: 1, kind: input, shape index: {}]
  %s2 = inlined_call_operand.vmem [shape: f32[1,96], index: 2, kind: input, shape index: {}]
  %s3 = inlined_call_operand.hbm [shape: f32[32,32], index: 3, kind: input, shape index: {}]
  %s4 = inlined_call_operand.vmem [shape: f32[1,32], index: 4, kind: input, shape index: {}]
  %s5 = inlined_call_operand.hbm [shape: f32[8,2,32], index: 5, kind: output, shape index: {}]
  %s6 = sld [smem:[#allocation0]]
  $region42: #{tpu_custom_call.1} parent=0
    _
  %s8 = ssub.s32 1, %s6
  %s9 = scalar_select 0, %s8, %s6
  $region1: #{tpu_custom_call.1} parent=0
    #allocation2 [shape = 'u8[8192]{0}', space=vmem, size = 0x2000, scoped, tag = 'input window, operand 0, single buffered']
    #allocation3 [shape = 's32[1]{0}', space=sflag, size = 0x4, scoped, tag = 'scoped memory for tpu_custom_call.1']
    #allocation4 [shape = 's32[1]{0}', space=sflag, size = 0x4, scoped, tag = 'scoped memory for tpu_custom_call.1']
    #allocation5 [shape = 'u8[16384]{0}', space=vmem, size = 0x4000, scoped, tag = 'input window, operand 1, single buffered']
    #allocation6 [shape = 's32[1]{0}', space=sflag, size = 0x4, scoped, tag = 'scoped memory for tpu_custom_call.1']
    #allocation7 [shape = 'u8[16384]{0}', space=vmem, size = 0x4000, scoped, tag = 'input window, operand 3, single buffered']
    #allocation8 [shape = 'u8[8192]{0}', space=vmem, size = 0x2000, scoped, tag = 'output window, operand 0, single buffered']
    %10 = vsyncpa [#allocation3], 0
    %11 = vsyncpa [#allocation6], 0
    %12 = vsyncpa [#allocation4], 0
    // Predicated region
    $region2: #{tpu_custom_call.1} parent=1 // pred_check
      _
    $region3: #{tpu_custom_call.1} parent=1 // pred_check_branch
      %14 = sbr.rel (0) target = $region5
    $region4: #{tpu_custom_call.1} parent=1 // pred_region
      %s16 = ssub.s32 256, 256
      %17 = vsyncadd [#allocation3], %s16
      %s18 = sshll.u32 [#allocation2], 4
      %s19 = int_to_ptr.vmem [resolvable:$true] %s18
      %24 = dma.hbm_to_vmem [thread:$0]  %s0, 256, %s19, [#allocation3], 32, 32, 2
    $region5: #{tpu_custom_call.1} parent=1 // pred_fallthru
      _
    // Predicated region
    $region6: #{tpu_custom_call.1} parent=1 // pred_check
      _
    $region7: #{tpu_custom_call.1} parent=1 // pred_check_branch
      %26 = sbr.rel (0) target = $region9
    $region8: #{tpu_custom_call.1} parent=1 // pred_region
      %s28 = ssub.s32 512, 512
      %29 = vsyncadd [#allocation6], %s28
      %s30 = sshll.u32 [#allocation5], 4
      %s31 = int_to_ptr.vmem [resolvable:$true] %s30
      %36 = dma.hbm_to_vmem [thread:$0]  %s1, 512, %s31, [#allocation6], 128, 128, 8
    $region9: #{tpu_custom_call.1} parent=1 // pred_fallthru
      _
    // Predicated region
    $region10: #{tpu_custom_call.1} parent=1 // pred_check
      _
    $region11: #{tpu_custom_call.1} parent=1 // pred_check_branch
      %38 = sbr.rel (0) target = $region13
    $region12: #{tpu_custom_call.1} parent=1 // pred_region
      _
    $region13: #{tpu_custom_call.1} parent=1 // pred_fallthru
      _
    // Predicated region
    $region14: #{tpu_custom_call.1} parent=1 // pred_check
      _
    $region15: #{tpu_custom_call.1} parent=1 // pred_check_branch
      %40 = sbr.rel (0) target = $region17
    $region16: #{tpu_custom_call.1} parent=1 // pred_region
      %s42 = ssub.s32 512, 512
      %43 = vsyncadd [#allocation6], %s42
      %s44 = sshll.u32 [#allocation7], 4
      %s45 = int_to_ptr.vmem [resolvable:$true] %s44
      %50 = dma.hbm_to_vmem [thread:$0]  %s3, 512, %s45, [#allocation6], 128, 128, 8
    $region17: #{tpu_custom_call.1} parent=1 // pred_fallthru
      _
    // Predicated region
    $region18: #{tpu_custom_call.1} parent=1 // pred_check
      _
    $region19: #{tpu_custom_call.1} parent=1 // pred_check_branch
      %52 = sbr.rel (0) target = $region21
    $region20: #{tpu_custom_call.1} parent=1 // pred_region
      _
    $region21: #{tpu_custom_call.1} parent=1 // pred_fallthru
      _
    // Predicated region
    $region22: #{tpu_custom_call.1} parent=1 // pred_check
      _
    $region23: #{tpu_custom_call.1} parent=1 // pred_check_branch
      %54 = sbr.rel (0) target = $region25
    $region24: #{tpu_custom_call.1} parent=1 // pred_region
      %55 = dma.done [#allocation3], 256
    $region25: #{tpu_custom_call.1} parent=1 // pred_fallthru
      _
    // Predicated region
    $region26: #{tpu_custom_call.1} parent=1 // pred_check
      _
    $region27: #{tpu_custom_call.1} parent=1 // pred_check_branch
      %57 = sbr.rel (0) target = $region29
    $region28: #{tpu_custom_call.1} parent=1 // pred_region
      %58 = dma.done [#allocation6], 512
    $region29: #{tpu_custom_call.1} parent=1 // pred_fallthru
      _
    // Predicated region
    $region30: #{tpu_custom_call.1} parent=1 // pred_check
      _
    $region31: #{tpu_custom_call.1} parent=1 // pred_check_branch
      %60 = sbr.rel (0) target = $region33
    $region32: #{tpu_custom_call.1} parent=1 // pred_region
      %61 = dma.done [#allocation6], 512
    $region33: #{tpu_custom_call.1} parent=1 // pred_fallthru
      _
    %v62 = vld [vmem:[#allocation2] sm:$0x3]
    %v63 = vld [vmem:[#allocation2 + $0x2] sm:$0x3]
    %v64 = vld [vmem:[#allocation2 + $0x4] sm:$0x3]
    %v65 = vld [vmem:[#allocation2 + $0x6] sm:$0x3]
    %v66 = vld [vmem:[#allocation2 + $0x8] sm:$0x3]
    %v67 = vld [vmem:[#allocation2 + $0xa] sm:$0x3]
    %v68 = vld [vmem:[#allocation2 + $0xc] sm:$0x3]
    %v69 = vld [vmem:[#allocation2 + $0xe] sm:$0x3]
    %v78 = vrot.slane %v63, 7
    %vm79 = vcmask 1041409
    %v80 = vsel %vm79, %v78, %v62
    %v81 = vrot.slane %v64, 6
    %vm82 = vcmask 1042434
    %v83 = vsel %vm82, %v81, %v80
    %v84 = vrot.slane %v65, 5
    %vm85 = vcmask 1043459
    %v86 = vsel %vm85, %v84, %v83
    %v87 = vrot.slane %v66, 4
    %vm88 = vcmask 1044484
    %v89 = vsel %vm88, %v87, %v86
    %v90 = vrot.slane %v67, 3
    %vm91 = vcmask 1045509
    %v92 = vsel %vm91, %v90, %v89
    %v93 = vrot.slane %v68, 2
    %vm94 = vcmask 1046534
    %v95 = vsel %vm94, %v93, %v92
    %v96 = vrot.slane %v69, 1
    %vm97 = vcmask 1047559
    %v98 = vsel %vm97, %v96, %v95
    %v99 = vrot.slane %v62, 1
    %v100 = vsel %vm79, %v63, %v99
    %v101 = vrot.slane %v64, 7
    %v102 = vsel %vm82, %v101, %v100
    %v103 = vrot.slane %v65, 6
    %v104 = vsel %vm85, %v103, %v102
    %v105 = vrot.slane %v66, 5
    %v106 = vsel %vm88, %v105, %v104
    %v107 = vrot.slane %v67, 4
    %v108 = vsel %vm91, %v107, %v106
    %v109 = vrot.slane %v68, 3
    %v110 = vsel %vm94, %v109, %v108
    %v111 = vrot.slane %v69, 2
    %v112 = vsel %vm97, %v111, %v110
    %v113 = vld [vmem:[#allocation5] sm:$0xff]
    %v114 = vld [vmem:[#allocation5 + $0x8] sm:$0xff]
    %v115 = vld [vmem:[#allocation5 + $0x10] sm:$0xff]
    %v116 = vld [vmem:[#allocation5 + $0x18] sm:$0xff]
    %v117 = vld [vmem:[%s2] sm:$0x1]
    %v119 = vlaneseq
    %v120 = vshrl.u32 %v119, 7
    %v121 = vsub.s32 0, %v120
    %v122 = vrot.slane %v117, %v121
    %vm124 = vcmask 261120
    %v125 = vsel %vm124, %v98, 0
    %v127 = vsel %vm124, %v112, 0
    %129 = vmatprep.subr.mxu0 0.0
    %130 = vmatpush1.msra.mxu0 %v113
    %131 = vmatprep.subr.mxu0 0.0
    %132 = vmatpush1.msra.mxu0 %v114
    %133 = vmatprep.subr.mxu0 0.0
    %134 = vmatpush1.msra.mxu0 %v115
    %135 = vmatprep.subr.mxu0 0.0
    %136 = vmatpush1.msra.mxu0 %v116
    %137 = vmatprep.subr.mxu0 0.0
    %138 = vmatpush1.msra.mxu0 0.0
    %139 = vmatprep.subr.mxu0 0.0
    %140 = vmatpush1.msra.mxu0 0.0
    %141 = vmatprep.subr.mxu0 0.0
    %142 = vmatpush1.msra.mxu0 0.0
    %143 = vmatprep.subr.mxu0 0.0
    %144 = vmatpush1.msra.mxu0 0.0
    %145 = vmatprep.subr.mxu0 0.0
    %146 = vmatpush1.msra.mxu0 0.0
    %147 = vmatprep.subr.mxu0 0.0
    %148 = vmatpush1.msra.mxu0 0.0
    %149 = vmatprep.subr.mxu0 0.0
    %150 = vmatpush1.msra.mxu0 0.0
    %151 = vmatprep.subr.mxu0 0.0
    %152 = vmatpush1.msra.mxu0 0.0
    %153 = vmatprep.subr.mxu0 0.0
    %154 = vmatpush1.msra.mxu0 0.0
    %155 = vmatprep.subr.mxu0 0.0
    %156 = vmatpush1.msra.mxu0 0.0
    %157 = vmatprep.subr.mxu0 0.0
    %158 = vmatpush1.msra.mxu0 0.0
    %159 = vmatprep.subr.mxu0 0.0
    %160 = vmatpush1.msra.mxu0 0.0
    %161 = vmatprep.subr.mxu0 0.0
    %162 = vmatpush1.msra.mxu0 0.0
    %163 = vmatprep.subr.mxu0 0.0
    %164 = vmatpush1.msra.mxu0 0.0
    %165 = vmatprep.subr.mxu0 0.0
    %166 = vmatpush1.msra.mxu0 0.0
    %167 = vmatprep.subr.mxu0 0.0
    %168 = vmatpush1.msra.mxu0 0.0
    %169 = vmatprep.subr.mxu0 0.0
    %170 = vmatpush1.msra.mxu0 0.0
    %171 = vmatprep.subr.mxu0 0.0
    %172 = vmatpush1.msra.mxu0 0.0
    %173 = vmatprep.subr.mxu0 0.0
    %174 = vmatpush1.msra.mxu0 0.0
    %175 = vmatprep.subr.mxu0 0.0
    %176 = vmatpush1.msra.mxu0 0.0
    %177 = vmatprep.subr.mxu0 0.0
    %178 = vmatpush1.msra.mxu0 0.0
    %179 = vmatprep.subr.mxu0 0.0
    %180 = vmatpush1.msra.mxu0 0.0
    %181 = vmatprep.subr.mxu0 0.0
    %182 = vmatpush1.msra.mxu0 0.0
    %183 = vmatprep.subr.mxu0 0.0
    %184 = vmatpush1.msra.mxu0 0.0
    %185 = vmatprep.subr.mxu0 0.0
    %186 = vmatpush1.msra.mxu0 0.0
    %187 = vmatprep.subr.mxu0 0.0
    %188 = vmatpush1.msra.mxu0 0.0
    %189 = vmatprep.subr.mxu0 0.0
    %190 = vmatpush1.msra.mxu0 0.0
    %191 = vmatprep.subr.mxu0 0.0
    %192 = vmatpush1.msra.mxu0 0.0
    %193 = vmatprep.mubr.f32.mxu0 0.0
    %194 = vmatmul.mubr.f32.gmra.mrb[0].mxu0 %v125
    %v195 = vpop.f32.mrb[0].mxu0
    %v196 = vadd.f32 %v122, %v195
    %v197 = vpop.f32.mrb[0].mxu0
    %198 = vmatprep.mubr.f32.mxu0 0.0
    %199 = vmatmul.mubr.f32.gmra.mrb[0].mxu0 %v127
    %v200 = vpop.f32.mrb[0].mxu0
    %v201 = vadd.f32 %v122, %v200
    %v202 = vpop.f32.mrb[0].mxu0
    %203 = vdwg.mxu0
    %v204 = vmul.f32 %v196, 0.35355338
    %v205 = vmul.f32 %v201, 0.35355338
    %207 = vrot.lane.b32.xlu0 %v196, 96
    %v208 = vpop.permute.xlu0 %207
    %vm209 = vcmask 64512
    %v211 = vsel %vm209, %v204, 0
    %v213 = vsel %vm209, %v208, 0
    %215 = vmatprep.subr.mxu0 0.0
    %216 = vmatpush1.xpose.msra.mxu0 %v213
    %217 = vmatprep.subr.mxu0 0.0
    %218 = vmatpush1.xpose.msra.mxu0 0.0
    %219 = vmatprep.subr.mxu0 0.0
    %220 = vmatpush1.xpose.msra.mxu0 0.0
    %221 = vmatprep.subr.mxu0 0.0
    %222 = vmatpush1.xpose.msra.mxu0 0.0
    %223 = vmatprep.subr.mxu0 0.0
    %224 = vmatpush1.xpose.msra.mxu0 0.0
    %225 = vmatprep.subr.mxu0 0.0
    %226 = vmatpush1.xpose.msra.mxu0 0.0
    %227 = vmatprep.subr.mxu0 0.0
    %228 = vmatpush1.xpose.msra.mxu0 0.0
    %229 = vmatprep.subr.mxu0 0.0
    %230 = vmatpush1.xpose.msra.mxu0 0.0
    %231 = vmatprep.subr.mxu0 0.0
    %232 = vmatpush1.xpose.msra.mxu0 0.0
    %233 = vmatprep.subr.mxu0 0.0
    %234 = vmatpush1.xpose.msra.mxu0 0.0
    %235 = vmatprep.subr.mxu0 0.0
    %236 = vmatpush1.xpose.msra.mxu0 0.0
    %237 = vmatprep.subr.mxu0 0.0
    %238 = vmatpush1.xpose.msra.mxu0 0.0
    %239 = vmatprep.subr.mxu0 0.0
    %240 = vmatpush1.xpose.msra.mxu0 0.0
    %241 = vmatprep.subr.mxu0 0.0
    %242 = vmatpush1.xpose.msra.mxu0 0.0
    %243 = vmatprep.subr.mxu0 0.0
    %244 = vmatpush1.xpose.msra.mxu0 0.0
    %245 = vmatprep.subr.mxu0 0.0
    %246 = vmatpush1.xpose.msra.mxu0 0.0
    %247 = vmatprep.subr.mxu0 0.0
    %248 = vmatpush1.xpose.msra.mxu0 0.0
    %249 = vmatprep.subr.mxu0 0.0
    %250 = vmatpush1.xpose.msra.mxu0 0.0
    %251 = vmatprep.subr.mxu0 0.0
    %252 = vmatpush1.xpose.msra.mxu0 0.0
    %253 = vmatprep.subr.mxu0 0.0
    %254 = vmatpush1.xpose.msra.mxu0 0.0
    %255 = vmatprep.subr.mxu0 0.0
    %256 = vmatpush1.xpose.msra.mxu0 0.0
    %257 = vmatprep.subr.mxu0 0.0
    %258 = vmatpush1.xpose.msra.mxu0 0.0
    %259 = vmatprep.subr.mxu0 0.0
    %260 = vmatpush1.xpose.msra.mxu0 0.0
    %261 = vmatprep.subr.mxu0 0.0
    %262 = vmatpush1.xpose.msra.mxu0 0.0
    %263 = vmatprep.subr.mxu0 0.0
    %264 = vmatpush1.xpose.msra.mxu0 0.0
    %265 = vmatprep.subr.mxu0 0.0
    %266 = vmatpush1.xpose.msra.mxu0 0.0
    %267 = vmatprep.subr.mxu0 0.0
    %268 = vmatpush1.xpose.msra.mxu0 0.0
    %269 = vmatprep.subr.mxu0 0.0
    %270 = vmatpush1.xpose.msra.mxu0 0.0
    %271 = vmatprep.subr.mxu0 0.0
    %272 = vmatpush1.xpose.msra.mxu0 0.0
    %273 = vmatprep.subr.mxu0 0.0
    %274 = vmatpush1.xpose.msra.mxu0 0.0
    %275 = vmatprep.subr.mxu0 0.0
    %276 = vmatpush1.xpose.msra.mxu0 0.0
    %277 = vmatprep.subr.mxu0 0.0
    %278 = vmatpush1.xpose.msra.mxu0 0.0
    %279 = vmatprep.mubr.f32.mxu0 0.0
    %280 = vmatmul.mubr.f32.gmra.mrb[0].mxu0 %v211
    %v281 = vpop.f32.mrb[0].mxu0
    %v282 = vadd.f32 0.0, %v281
    %v283 = vpop.f32.mrb[0].mxu0
    %284 = vdwg.mxu0
    %285 = vrot.lane.b32.xlu0 %v204, 120
    %v286 = vpop.permute.xlu0 %285
    %287 = vrot.lane.b32.xlu0 %v196, 88
    %v288 = vpop.permute.xlu0 %287
    %v289 = vsel %vm209, %v286, 0
    %v291 = vsel %vm209, %v288, 0
    %293 = vmatprep.subr.mxu0 0.0
    %294 = vmatpush1.xpose.msra.mxu0 %v291
    %295 = vmatprep.subr.mxu0 0.0
    %296 = vmatpush1.xpose.msra.mxu0 0.0
    %297 = vmatprep.subr.mxu0 0.0
    %298 = vmatpush1.xpose.msra.mxu0 0.0
    %299 = vmatprep.subr.mxu0 0.0
    %300 = vmatpush1.xpose.msra.mxu0 0.0
    %301 = vmatprep.subr.mxu0 0.0
    %302 = vmatpush1.xpose.msra.mxu0 0.0
    %303 = vmatprep.subr.mxu0 0.0
    %304 = vmatpush1.xpose.msra.mxu0 0.0
    %305 = vmatprep.subr.mxu0 0.0
    %306 = vmatpush1.xpose.msra.mxu0 0.0
    %307 = vmatprep.subr.mxu0 0.0
    %308 = vmatpush1.xpose.msra.mxu0 0.0
    %309 = vmatprep.subr.mxu0 0.0
    %310 = vmatpush1.xpose.msra.mxu0 0.0
    %311 = vmatprep.subr.mxu0 0.0
    %312 = vmatpush1.xpose.msra.mxu0 0.0
    %313 = vmatprep.subr.mxu0 0.0
    %314 = vmatpush1.xpose.msra.mxu0 0.0
    %315 = vmatprep.subr.mxu0 0.0
    %316 = vmatpush1.xpose.msra.mxu0 0.0
    %317 = vmatprep.subr.mxu0 0.0
    %318 = vmatpush1.xpose.msra.mxu0 0.0
    %319 = vmatprep.subr.mxu0 0.0
    %320 = vmatpush1.xpose.msra.mxu0 0.0
    %321 = vmatprep.subr.mxu0 0.0
    %322 = vmatpush1.xpose.msra.mxu0 0.0
    %323 = vmatprep.subr.mxu0 0.0
    %324 = vmatpush1.xpose.msra.mxu0 0.0
    %325 = vmatprep.subr.mxu0 0.0
    %326 = vmatpush1.xpose.msra.mxu0 0.0
    %327 = vmatprep.subr.mxu0 0.0
    %328 = vmatpush1.xpose.msra.mxu0 0.0
    %329 = vmatprep.subr.mxu0 0.0
    %330 = vmatpush1.xpose.msra.mxu0 0.0
    %331 = vmatprep.subr.mxu0 0.0
    %332 = vmatpush1.xpose.msra.mxu0 0.0
    %333 = vmatprep.subr.mxu0 0.0
    %334 = vmatpush1.xpose.msra.mxu0 0.0
    %335 = vmatprep.subr.mxu0 0.0
    %336 = vmatpush1.xpose.msra.mxu0 0.0
    %337 = vmatprep.subr.mxu0 0.0
    %338 = vmatpush1.xpose.msra.mxu0 0.0
    %339 = vmatprep.subr.mxu0 0.0
    %340 = vmatpush1.xpose.msra.mxu0 0.0
    %341 = vmatprep.subr.mxu0 0.0
    %342 = vmatpush1.xpose.msra.mxu0 0.0
    %343 = vmatprep.subr.mxu0 0.0
    %344 = vmatpush1.xpose.msra.mxu0 0.0
    %345 = vmatprep.subr.mxu0 0.0
    %346 = vmatpush1.xpose.msra.mxu0 0.0
    %347 = vmatprep.subr.mxu0 0.0
    %348 = vmatpush1.xpose.msra.mxu0 0.0
    %349 = vmatprep.subr.mxu0 0.0
    %350 = vmatpush1.xpose.msra.mxu0 0.0
    %351 = vmatprep.subr.mxu0 0.0
    %352 = vmatpush1.xpose.msra.mxu0 0.0
    %353 = vmatprep.subr.mxu0 0.0
    %354 = vmatpush1.xpose.msra.mxu0 0.0
    %355 = vmatprep.subr.mxu0 0.0
    %356 = vmatpush1.xpose.msra.mxu0 0.0
    %357 = vmatprep.mubr.f32.mxu0 0.0
    %358 = vmatmul.mubr.f32.gmra.mrb[0].mxu0 %v289
    %v359 = vpop.f32.mrb[0].mxu0
    %v360 = vadd.f32 0.0, %v359
    %v361 = vpop.f32.mrb[0].mxu0
    %362 = vdwg.mxu0
    %363 = vrot.lane.b32.xlu0 %v204, 112
    %v364 = vpop.permute.xlu0 %363
    %365 = vrot.lane.b32.xlu0 %v196, 80
    %v366 = vpop.permute.xlu0 %365
    %v367 = vsel %vm209, %v364, 0
    %v369 = vsel %vm209, %v366, 0
    %371 = vmatprep.subr.mxu0 0.0
    %372 = vmatpush1.xpose.msra.mxu0 %v369
    %373 = vmatprep.subr.mxu0 0.0
    %374 = vmatpush1.xpose.msra.mxu0 0.0
    %375 = vmatprep.subr.mxu0 0.0
    %376 = vmatpush1.xpose.msra.mxu0 0.0
    %377 = vmatprep.subr.mxu0 0.0
    %378 = vmatpush1.xpose.msra.mxu0 0.0
    %379 = vmatprep.subr.mxu0 0.0
    %380 = vmatpush1.xpose.msra.mxu0 0.0
    %381 = vmatprep.subr.mxu0 0.0
    %382 = vmatpush1.xpose.msra.mxu0 0.0
    %383 = vmatprep.subr.mxu0 0.0
    %384 = vmatpush1.xpose.msra.mxu0 0.0
    %385 = vmatprep.subr.mxu0 0.0
    %386 = vmatpush1.xpose.msra.mxu0 0.0
    %387 = vmatprep.subr.mxu0 0.0
    %388 = vmatpush1.xpose.msra.mxu0 0.0
    %389 = vmatprep.subr.mxu0 0.0
    %390 = vmatpush1.xpose.msra.mxu0 0.0
    %391 = vmatprep.subr.mxu0 0.0
    %392 = vmatpush1.xpose.msra.mxu0 0.0
    %393 = vmatprep.subr.mxu0 0.0
    %394 = vmatpush1.xpose.msra.mxu0 0.0
    %395 = vmatprep.subr.mxu0 0.0
    %396 = vmatpush1.xpose.msra.mxu0 0.0
    %397 = vmatprep.subr.mxu0 0.0
    %398 = vmatpush1.xpose.msra.mxu0 0.0
    %399 = vmatprep.subr.mxu0 0.0
    %400 = vmatpush1.xpose.msra.mxu0 0.0
    %401 = vmatprep.subr.mxu0 0.0
    %402 = vmatpush1.xpose.msra.mxu0 0.0
    %403 = vmatprep.subr.mxu0 0.0
    %404 = vmatpush1.xpose.msra.mxu0 0.0
    %405 = vmatprep.subr.mxu0 0.0
    %406 = vmatpush1.xpose.msra.mxu0 0.0
    %407 = vmatprep.subr.mxu0 0.0
    %408 = vmatpush1.xpose.msra.mxu0 0.0
    %409 = vmatprep.subr.mxu0 0.0
    %410 = vmatpush1.xpose.msra.mxu0 0.0
    %411 = vmatprep.subr.mxu0 0.0
    %412 = vmatpush1.xpose.msra.mxu0 0.0
    %413 = vmatprep.subr.mxu0 0.0
    %414 = vmatpush1.xpose.msra.mxu0 0.0
    %415 = vmatprep.subr.mxu0 0.0
    %416 = vmatpush1.xpose.msra.mxu0 0.0
    %417 = vmatprep.subr.mxu0 0.0
    %418 = vmatpush1.xpose.msra.mxu0 0.0
    %419 = vmatprep.subr.mxu0 0.0
    %420 = vmatpush1.xpose.msra.mxu0 0.0
    %421 = vmatprep.subr.mxu0 0.0
    %422 = vmatpush1.xpose.msra.mxu0 0.0
    %423 = vmatprep.subr.mxu0 0.0
    %424 = vmatpush1.xpose.msra.mxu0 0.0
    %425 = vmatprep.subr.mxu0 0.0
    %426 = vmatpush1.xpose.msra.mxu0 0.0
    %427 = vmatprep.subr.mxu0 0.0
    %428 = vmatpush1.xpose.msra.mxu0 0.0
    %429 = vmatprep.subr.mxu0 0.0
    %430 = vmatpush1.xpose.msra.mxu0 0.0
    %431 = vmatprep.subr.mxu0 0.0
    %432 = vmatpush1.xpose.msra.mxu0 0.0
    %433 = vmatprep.subr.mxu0 0.0
    %434 = vmatpush1.xpose.msra.mxu0 0.0
    %435 = vmatprep.mubr.f32.mxu0 0.0
    %436 = vmatmul.mubr.f32.gmra.mrb[0].mxu0 %v367
    %v437 = vpop.f32.mrb[0].mxu0
    %v438 = vadd.f32 0.0, %v437
    %v439 = vpop.f32.mrb[0].mxu0
    %440 = vdwg.mxu0
    %441 = vrot.lane.b32.xlu0 %v204, 104
    %v442 = vpop.permute.xlu0 %441
    %443 = vrot.lane.b32.xlu0 %v196, 72
    %v444 = vpop.permute.xlu0 %443
    %v445 = vsel %vm209, %v442, 0
    %v447 = vsel %vm209, %v444, 0
    %449 = vmatprep.subr.mxu0 0.0
    %450 = vmatpush1.xpose.msra.mxu0 %v447
    %451 = vmatprep.subr.mxu0 0.0
    %452 = vmatpush1.xpose.msra.mxu0 0.0
    %453 = vmatprep.subr.mxu0 0.0
    %454 = vmatpush1.xpose.msra.mxu0 0.0
    %455 = vmatprep.subr.mxu0 0.0
    %456 = vmatpush1.xpose.msra.mxu0 0.0
    %457 = vmatprep.subr.mxu0 0.0
    %458 = vmatpush1.xpose.msra.mxu0 0.0
    %459 = vmatprep.subr.mxu0 0.0
    %460 = vmatpush1.xpose.msra.mxu0 0.0
    %461 = vmatprep.subr.mxu0 0.0
    %462 = vmatpush1.xpose.msra.mxu0 0.0
    %463 = vmatprep.subr.mxu0 0.0
    %464 = vmatpush1.xpose.msra.mxu0 0.0
    %465 = vmatprep.subr.mxu0 0.0
    %466 = vmatpush1.xpose.msra.mxu0 0.0
    %467 = vmatprep.subr.mxu0 0.0
    %468 = vmatpush1.xpose.msra.mxu0 0.0
    %469 = vmatprep.subr.mxu0 0.0
    %470 = vmatpush1.xpose.msra.mxu0 0.0
    %471 = vmatprep.subr.mxu0 0.0
    %472 = vmatpush1.xpose.msra.mxu0 0.0
    %473 = vmatprep.subr.mxu0 0.0
    %474 = vmatpush1.xpose.msra.mxu0 0.0
    %475 = vmatprep.subr.mxu0 0.0
    %476 = vmatpush1.xpose.msra.mxu0 0.0
    %477 = vmatprep.subr.mxu0 0.0
    %478 = vmatpush1.xpose.msra.mxu0 0.0
    %479 = vmatprep.subr.mxu0 0.0
    %480 = vmatpush1.xpose.msra.mxu0 0.0
    %481 = vmatprep.subr.mxu0 0.0
    %482 = vmatpush1.xpose.msra.mxu0 0.0
    %483 = vmatprep.subr.mxu0 0.0
    %484 = vmatpush1.xpose.msra.mxu0 0.0
    %485 = vmatprep.subr.mxu0 0.0
    %486 = vmatpush1.xpose.msra.mxu0 0.0
    %487 = vmatprep.subr.mxu0 0.0
    %488 = vmatpush1.xpose.msra.mxu0 0.0
    %489 = vmatprep.subr.mxu0 0.0
    %490 = vmatpush1.xpose.msra.mxu0 0.0
    %491 = vmatprep.subr.mxu0 0.0
    %492 = vmatpush1.xpose.msra.mxu0 0.0
    %493 = vmatprep.subr.mxu0 0.0
    %494 = vmatpush1.xpose.msra.mxu0 0.0
    %495 = vmatprep.subr.mxu0 0.0
    %496 = vmatpush1.xpose.msra.mxu0 0.0
    %497 = vmatprep.subr.mxu0 0.0
    %498 = vmatpush1.xpose.msra.mxu0 0.0
    %499 = vmatprep.subr.mxu0 0.0
    %500 = vmatpush1.xpose.msra.mxu0 0.0
    %501 = vmatprep.subr.mxu0 0.0
    %502 = vmatpush1.xpose.msra.mxu0 0.0
    %503 = vmatprep.subr.mxu0 0.0
    %504 = vmatpush1.xpose.msra.mxu0 0.0
    %505 = vmatprep.subr.mxu0 0.0
    %506 = vmatpush1.xpose.msra.mxu0 0.0
    %507 = vmatprep.subr.mxu0 0.0
    %508 = vmatpush1.xpose.msra.mxu0 0.0
    %509 = vmatprep.subr.mxu0 0.0
    %510 = vmatpush1.xpose.msra.mxu0 0.0
    %511 = vmatprep.subr.mxu0 0.0
    %512 = vmatpush1.xpose.msra.mxu0 0.0
    %513 = vmatprep.mubr.f32.mxu0 0.0
    %514 = vmatmul.mubr.f32.gmra.mrb[0].mxu0 %v445
    %v515 = vpop.f32.mrb[0].mxu0
    %v516 = vadd.f32 0.0, %v515
    %v517 = vpop.f32.mrb[0].mxu0
    %518 = vdwg.mxu0
    %520 = vrot.lane.b32.xlu0 %v201, 96
    %v521 = vpop.permute.xlu0 %520
    %v523 = vsel %vm209, %v205, 0
    %v525 = vsel %vm209, %v521, 0
    %527 = vmatprep.subr.mxu0 0.0
    %528 = vmatpush1.xpose.msra.mxu0 %v525
    %529 = vmatprep.subr.mxu0 0.0
    %530 = vmatpush1.xpose.msra.mxu0 0.0
    %531 = vmatprep.subr.mxu0 0.0
    %532 = vmatpush1.xpose.msra.mxu0 0.0
    %533 = vmatprep.subr.mxu0 0.0
    %534 = vmatpush1.xpose.msra.mxu0 0.0
    %535 = vmatprep.subr.mxu0 0.0
    %536 = vmatpush1.xpose.msra.mxu0 0.0
    %537 = vmatprep.subr.mxu0 0.0
    %538 = vmatpush1.xpose.msra.mxu0 0.0
    %539 = vmatprep.subr.mxu0 0.0
    %540 = vmatpush1.xpose.msra.mxu0 0.0
    %541 = vmatprep.subr.mxu0 0.0
    %542 = vmatpush1.xpose.msra.mxu0 0.0
    %543 = vmatprep.subr.mxu0 0.0
    %544 = vmatpush1.xpose.msra.mxu0 0.0
    %545 = vmatprep.subr.mxu0 0.0
    %546 = vmatpush1.xpose.msra.mxu0 0.0
    %547 = vmatprep.subr.mxu0 0.0
    %548 = vmatpush1.xpose.msra.mxu0 0.0
    %549 = vmatprep.subr.mxu0 0.0
    %550 = vmatpush1.xpose.msra.mxu0 0.0
    %551 = vmatprep.subr.mxu0 0.0
    %552 = vmatpush1.xpose.msra.mxu0 0.0
    %553 = vmatprep.subr.mxu0 0.0
    %554 = vmatpush1.xpose.msra.mxu0 0.0
    %555 = vmatprep.subr.mxu0 0.0
    %556 = vmatpush1.xpose.msra.mxu0 0.0
    %557 = vmatprep.subr.mxu0 0.0
    %558 = vmatpush1.xpose.msra.mxu0 0.0
    %559 = vmatprep.subr.mxu0 0.0
    %560 = vmatpush1.xpose.msra.mxu0 0.0
    %561 = vmatprep.subr.mxu0 0.0
    %562 = vmatpush1.xpose.msra.mxu0 0.0
    %563 = vmatprep.subr.mxu0 0.0
    %564 = vmatpush1.xpose.msra.mxu0 0.0
    %565 = vmatprep.subr.mxu0 0.0
    %566 = vmatpush1.xpose.msra.mxu0 0.0
    %567 = vmatprep.subr.mxu0 0.0
    %568 = vmatpush1.xpose.msra.mxu0 0.0
    %569 = vmatprep.subr.mxu0 0.0
    %570 = vmatpush1.xpose.msra.mxu0 0.0
    %571 = vmatprep.subr.mxu0 0.0
    %572 = vmatpush1.xpose.msra.mxu0 0.0
    %573 = vmatprep.subr.mxu0 0.0
    %574 = vmatpush1.xpose.msra.mxu0 0.0
    %575 = vmatprep.subr.mxu0 0.0
    %576 = vmatpush1.xpose.msra.mxu0 0.0
    %577 = vmatprep.subr.mxu0 0.0
    %578 = vmatpush1.xpose.msra.mxu0 0.0
    %579 = vmatprep.subr.mxu0 0.0
    %580 = vmatpush1.xpose.msra.mxu0 0.0
    %581 = vmatprep.subr.mxu0 0.0
    %582 = vmatpush1.xpose.msra.mxu0 0.0
    %583 = vmatprep.subr.mxu0 0.0
    %584 = vmatpush1.xpose.msra.mxu0 0.0
    %585 = vmatprep.subr.mxu0 0.0
    %586 = vmatpush1.xpose.msra.mxu0 0.0
    %587 = vmatprep.subr.mxu0 0.0
    %588 = vmatpush1.xpose.msra.mxu0 0.0
    %589 = vmatprep.subr.mxu0 0.0
    %590 = vmatpush1.xpose.msra.mxu0 0.0
    %591 = vmatprep.mubr.f32.mxu0 0.0
    %592 = vmatmul.mubr.f32.gmra.mrb[0].mxu0 %v523
    %v593 = vpop.f32.mrb[0].mxu0
    %v594 = vadd.f32 0.0, %v593
    %v595 = vpop.f32.mrb[0].mxu0
    %596 = vdwg.mxu0
    %597 = vrot.lane.b32.xlu0 %v205, 120
    %v598 = vpop.permute.xlu0 %597
    %599 = vrot.lane.b32.xlu0 %v201, 88
    %v600 = vpop.permute.xlu0 %599
    %v601 = vsel %vm209, %v598, 0
    %v603 = vsel %vm209, %v600, 0
    %605 = vmatprep.subr.mxu0 0.0
    %606 = vmatpush1.xpose.msra.mxu0 %v603
    %607 = vmatprep.subr.mxu0 0.0
    %608 = vmatpush1.xpose.msra.mxu0 0.0
    %609 = vmatprep.subr.mxu0 0.0
    %610 = vmatpush1.xpose.msra.mxu0 0.0
    %611 = vmatprep.subr.mxu0 0.0
    %612 = vmatpush1.xpose.msra.mxu0 0.0
    %613 = vmatprep.subr.mxu0 0.0
    %614 = vmatpush1.xpose.msra.mxu0 0.0
    %615 = vmatprep.subr.mxu0 0.0
    %616 = vmatpush1.xpose.msra.mxu0 0.0
    %617 = vmatprep.subr.mxu0 0.0
    %618 = vmatpush1.xpose.msra.mxu0 0.0
    %619 = vmatprep.subr.mxu0 0.0
    %620 = vmatpush1.xpose.msra.mxu0 0.0
    %621 = vmatprep.subr.mxu0 0.0
    %622 = vmatpush1.xpose.msra.mxu0 0.0
    %623 = vmatprep.subr.mxu0 0.0
    %624 = vmatpush1.xpose.msra.mxu0 0.0
    %625 = vmatprep.subr.mxu0 0.0
    %626 = vmatpush1.xpose.msra.mxu0 0.0
    %627 = vmatprep.subr.mxu0 0.0
    %628 = vmatpush1.xpose.msra.mxu0 0.0
    %629 = vmatprep.subr.mxu0 0.0
    %630 = vmatpush1.xpose.msra.mxu0 0.0
    %631 = vmatprep.subr.mxu0 0.0
    %632 = vmatpush1.xpose.msra.mxu0 0.0
    %633 = vmatprep.subr.mxu0 0.0
    %634 = vmatpush1.xpose.msra.mxu0 0.0
    %635 = vmatprep.subr.mxu0 0.0
    %636 = vmatpush1.xpose.msra.mxu0 0.0
    %637 = vmatprep.subr.mxu0 0.0
    %638 = vmatpush1.xpose.msra.mxu0 0.0
    %639 = vmatprep.subr.mxu0 0.0
    %640 = vmatpush1.xpose.msra.mxu0 0.0
    %641 = vmatprep.subr.mxu0 0.0
    %642 = vmatpush1.xpose.msra.mxu0 0.0
    %643 = vmatprep.subr.mxu0 0.0
    %644 = vmatpush1.xpose.msra.mxu0 0.0
    %645 = vmatprep.subr.mxu0 0.0
    %646 = vmatpush1.xpose.msra.mxu0 0.0
    %647 = vmatprep.subr.mxu0 0.0
    %648 = vmatpush1.xpose.msra.mxu0 0.0
    %649 = vmatprep.subr.mxu0 0.0
    %650 = vmatpush1.xpose.msra.mxu0 0.0
    %651 = vmatprep.subr.mxu0 0.0
    %652 = vmatpush1.xpose.msra.mxu0 0.0
    %653 = vmatprep.subr.mxu0 0.0
    %654 = vmatpush1.xpose.msra.mxu0 0.0
    %655 = vmatprep.subr.mxu0 0.0
    %656 = vmatpush1.xpose.msra.mxu0 0.0
    %657 = vmatprep.subr.mxu0 0.0
    %658 = vmatpush1.xpose.msra.mxu0 0.0
    %659 = vmatprep.subr.mxu0 0.0
    %660 = vmatpush1.xpose.msra.mxu0 0.0
    %661 = vmatprep.subr.mxu0 0.0
    %662 = vmatpush1.xpose.msra.mxu0 0.0
    %663 = vmatprep.subr.mxu0 0.0
    %664 = vmatpush1.xpose.msra.mxu0 0.0
    %665 = vmatprep.subr.mxu0 0.0
    %666 = vmatpush1.xpose.msra.mxu0 0.0
    %667 = vmatprep.subr.mxu0 0.0
    %668 = vmatpush1.xpose.msra.mxu0 0.0
    %669 = vmatprep.mubr.f32.mxu0 0.0
    %670 = vmatmul.mubr.f32.gmra.mrb[0].mxu0 %v601
    %v671 = vpop.f32.mrb[0].mxu0
    %v672 = vadd.f32 0.0, %v671
    %v673 = vpop.f32.mrb[0].mxu0
    %674 = vdwg.mxu0
    %675 = vrot.lane.b32.xlu0 %v205, 112
    %v676 = vpop.permute.xlu0 %675
    %677 = vrot.lane.b32.xlu0 %v201, 80
    %v678 = vpop.permute.xlu0 %677
    %v679 = vsel %vm209, %v676, 0
    %v681 = vsel %vm209, %v678, 0
    %683 = vmatprep.subr.mxu0 0.0
    %684 = vmatpush1.xpose.msra.mxu0 %v681
    %685 = vmatprep.subr.mxu0 0.0
    %686 = vmatpush1.xpose.msra.mxu0 0.0
    %687 = vmatprep.subr.mxu0 0.0
    %688 = vmatpush1.xpose.msra.mxu0 0.0
    %689 = vmatprep.subr.mxu0 0.0
    %690 = vmatpush1.xpose.msra.mxu0 0.0
    %691 = vmatprep.subr.mxu0 0.0
    %692 = vmatpush1.xpose.msra.mxu0 0.0
    %693 = vmatprep.subr.mxu0 0.0
    %694 = vmatpush1.xpose.msra.mxu0 0.0
    %695 = vmatprep.subr.mxu0 0.0
    %696 = vmatpush1.xpose.msra.mxu0 0.0
    %697 = vmatprep.subr.mxu0 0.0
    %698 = vmatpush1.xpose.msra.mxu0 0.0
    %699 = vmatprep.subr.mxu0 0.0
    %700 = vmatpush1.xpose.msra.mxu0 0.0
    %701 = vmatprep.subr.mxu0 0.0
    %702 = vmatpush1.xpose.msra.mxu0 0.0
    %703 = vmatprep.subr.mxu0 0.0
    %704 = vmatpush1.xpose.msra.mxu0 0.0
    %705 = vmatprep.subr.mxu0 0.0
    %706 = vmatpush1.xpose.msra.mxu0 0.0
    %707 = vmatprep.subr.mxu0 0.0
    %708 = vmatpush1.xpose.msra.mxu0 0.0
    %709 = vmatprep.subr.mxu0 0.0
    %710 = vmatpush1.xpose.msra.mxu0 0.0
    %711 = vmatprep.subr.mxu0 0.0
    %712 = vmatpush1.xpose.msra.mxu0 0.0
    %713 = vmatprep.subr.mxu0 0.0
    %714 = vmatpush1.xpose.msra.mxu0 0.0
    %715 = vmatprep.subr.mxu0 0.0
    %716 = vmatpush1.xpose.msra.mxu0 0.0
    %717 = vmatprep.subr.mxu0 0.0
    %718 = vmatpush1.xpose.msra.mxu0 0.0
    %719 = vmatprep.subr.mxu0 0.0
    %720 = vmatpush1.xpose.msra.mxu0 0.0
    %721 = vmatprep.subr.mxu0 0.0
    %722 = vmatpush1.xpose.msra.mxu0 0.0
    %723 = vmatprep.subr.mxu0 0.0
    %724 = vmatpush1.xpose.msra.mxu0 0.0
    %725 = vmatprep.subr.mxu0 0.0
    %726 = vmatpush1.xpose.msra.mxu0 0.0
    %727 = vmatprep.subr.mxu0 0.0
    %728 = vmatpush1.xpose.msra.mxu0 0.0
    %729 = vmatprep.subr.mxu0 0.0
    %730 = vmatpush1.xpose.msra.mxu0 0.0
    %731 = vmatprep.subr.mxu0 0.0
    %732 = vmatpush1.xpose.msra.mxu0 0.0
    %733 = vmatprep.subr.mxu0 0.0
    %734 = vmatpush1.xpose.msra.mxu0 0.0
    %735 = vmatprep.subr.mxu0 0.0
    %736 = vmatpush1.xpose.msra.mxu0 0.0
    %737 = vmatprep.subr.mxu0 0.0
    %738 = vmatpush1.xpose.msra.mxu0 0.0
    %739 = vmatprep.subr.mxu0 0.0
    %740 = vmatpush1.xpose.msra.mxu0 0.0
    %741 = vmatprep.subr.mxu0 0.0
    %742 = vmatpush1.xpose.msra.mxu0 0.0
    %743 = vmatprep.subr.mxu0 0.0
    %744 = vmatpush1.xpose.msra.mxu0 0.0
    %745 = vmatprep.subr.mxu0 0.0
    %746 = vmatpush1.xpose.msra.mxu0 0.0
    %747 = vmatprep.mubr.f32.mxu0 0.0
    %748 = vmatmul.mubr.f32.gmra.mrb[0].mxu0 %v679
    %v749 = vpop.f32.mrb[0].mxu0
    %v750 = vadd.f32 0.0, %v749
    %v751 = vpop.f32.mrb[0].mxu0
    %752 = vdwg.mxu0
    %753 = vrot.lane.b32.xlu0 %v205, 104
    %v754 = vpop.permute.xlu0 %753
    %755 = vrot.lane.b32.xlu0 %v201, 72
    %v756 = vpop.permute.xlu0 %755
    %v757 = vsel %vm209, %v754, 0
    %v759 = vsel %vm209, %v756, 0
    %761 = vmatprep.subr.mxu0 0.0
    %762 = vmatpush1.xpose.msra.mxu0 %v759
    %763 = vmatprep.subr.mxu0 0.0
    %764 = vmatpush1.xpose.msra.mxu0 0.0
    %765 = vmatprep.subr.mxu0 0.0
    %766 = vmatpush1.xpose.msra.mxu0 0.0
    %767 = vmatprep.subr.mxu0 0.0
    %768 = vmatpush1.xpose.msra.mxu0 0.0
    %769 = vmatprep.subr.mxu0 0.0
    %770 = vmatpush1.xpose.msra.mxu0 0.0
    %771 = vmatprep.subr.mxu0 0.0
    %772 = vmatpush1.xpose.msra.mxu0 0.0
    %773 = vmatprep.subr.mxu0 0.0
    %774 = vmatpush1.xpose.msra.mxu0 0.0
    %775 = vmatprep.subr.mxu0 0.0
    %776 = vmatpush1.xpose.msra.mxu0 0.0
    %777 = vmatprep.subr.mxu0 0.0
    %778 = vmatpush1.xpose.msra.mxu0 0.0
    %779 = vmatprep.subr.mxu0 0.0
    %780 = vmatpush1.xpose.msra.mxu0 0.0
    %781 = vmatprep.subr.mxu0 0.0
    %782 = vmatpush1.xpose.msra.mxu0 0.0
    %783 = vmatprep.subr.mxu0 0.0
    %784 = vmatpush1.xpose.msra.mxu0 0.0
    %785 = vmatprep.subr.mxu0 0.0
    %786 = vmatpush1.xpose.msra.mxu0 0.0
    %787 = vmatprep.subr.mxu0 0.0
    %788 = vmatpush1.xpose.msra.mxu0 0.0
    %789 = vmatprep.subr.mxu0 0.0
    %790 = vmatpush1.xpose.msra.mxu0 0.0
    %791 = vmatprep.subr.mxu0 0.0
    %792 = vmatpush1.xpose.msra.mxu0 0.0
    %793 = vmatprep.subr.mxu0 0.0
    %794 = vmatpush1.xpose.msra.mxu0 0.0
    %795 = vmatprep.subr.mxu0 0.0
    %796 = vmatpush1.xpose.msra.mxu0 0.0
    %797 = vmatprep.subr.mxu0 0.0
    %798 = vmatpush1.xpose.msra.mxu0 0.0
    %799 = vmatprep.subr.mxu0 0.0
    %800 = vmatpush1.xpose.msra.mxu0 0.0
    %801 = vmatprep.subr.mxu0 0.0
    %802 = vmatpush1.xpose.msra.mxu0 0.0
    %803 = vmatprep.subr.mxu0 0.0
    %804 = vmatpush1.xpose.msra.mxu0 0.0
    %805 = vmatprep.subr.mxu0 0.0
    %806 = vmatpush1.xpose.msra.mxu0 0.0
    %807 = vmatprep.subr.mxu0 0.0
    %808 = vmatpush1.xpose.msra.mxu0 0.0
    %809 = vmatprep.subr.mxu0 0.0
    %810 = vmatpush1.xpose.msra.mxu0 0.0
    %811 = vmatprep.subr.mxu0 0.0
    %812 = vmatpush1.xpose.msra.mxu0 0.0
    %813 = vmatprep.subr.mxu0 0.0
    %814 = vmatpush1.xpose.msra.mxu0 0.0
    %815 = vmatprep.subr.mxu0 0.0
    %816 = vmatpush1.xpose.msra.mxu0 0.0
    %817 = vmatprep.subr.mxu0 0.0
    %818 = vmatpush1.xpose.msra.mxu0 0.0
    %819 = vmatprep.subr.mxu0 0.0
    %820 = vmatpush1.xpose.msra.mxu0 0.0
    %821 = vmatprep.subr.mxu0 0.0
    %822 = vmatpush1.xpose.msra.mxu0 0.0
    %823 = vmatprep.subr.mxu0 0.0
    %824 = vmatpush1.xpose.msra.mxu0 0.0
    %825 = vmatprep.mubr.f32.mxu0 0.0
    %826 = vmatmul.mubr.f32.gmra.mrb[0].mxu0 %v757
    %v827 = vpop.f32.mrb[0].mxu0
    %v828 = vadd.f32 0.0, %v827
    %v829 = vpop.f32.mrb[0].mxu0
    %830 = vdwg.mxu0
    %v831 = vsel %vm209, %v282, -inf
    %832 = vmax.xlane.f32.xlu0 %v831
    %v833 = vpop.xlane.xlu0 %832
    %v834 = vsel %vm209, %v360, -inf
    %835 = vmax.xlane.f32.xlu0 %v834
    %v836 = vpop.xlane.xlu0 %835
    %v837 = vsel %vm209, %v438, -inf
    %838 = vmax.xlane.f32.xlu0 %v837
    %v839 = vpop.xlane.xlu0 %838
    %v840 = vsel %vm209, %v516, -inf
    %841 = vmax.xlane.f32.xlu0 %v840
    %v842 = vpop.xlane.xlu0 %841
    %v843 = vsel %vm209, %v594, -inf
    %844 = vmax.xlane.f32.xlu0 %v843
    %v845 = vpop.xlane.xlu0 %844
    %v846 = vsel %vm209, %v672, -inf
    %847 = vmax.xlane.f32.xlu0 %v846
    %v848 = vpop.xlane.xlu0 %847
    %v849 = vsel %vm209, %v750, -inf
    %850 = vmax.xlane.f32.xlu0 %v849
    %v851 = vpop.xlane.xlu0 %850
    %v852 = vsel %vm209, %v828, -inf
    %853 = vmax.xlane.f32.xlu0 %v852
    %v854 = vpop.xlane.xlu0 %853
    %v855 = vsub.f32 %v282, %v833
    %v856 = vsub.f32 %v360, %v836
    %v857 = vsub.f32 %v438, %v839
    %v858 = vsub.f32 %v516, %v842
    %v859 = vsub.f32 %v594, %v845
    %v860 = vsub.f32 %v672, %v848
    %v861 = vsub.f32 %v750, %v851
    %v862 = vsub.f32 %v828, %v854
    %v863 = vmul.f32 %v855, 1.442695
    %v864 = vpow.pop %v863
    %v865 = vmul.f32 %v856, 1.442695
    %v866 = vpow.pop %v865
    %v867 = vmul.f32 %v857, 1.442695
    %v868 = vpow.pop %v867
    %v869 = vmul.f32 %v858, 1.442695
    %v870 = vpow.pop %v869
    %v871 = vmul.f32 %v859, 1.442695
    %v872 = vpow.pop %v871
    %v873 = vmul.f32 %v860, 1.442695
    %v874 = vpow.pop %v873
    %v875 = vmul.f32 %v861, 1.442695
    %v876 = vpow.pop %v875
    %v877 = vmul.f32 %v862, 1.442695
    %v878 = vpow.pop %v877
    %v879 = vsel %vm209, %v864, 0.0
    %880 = vadd.xlane.f32.xlu0 %v879
    %v881 = vpop.xlane.xlu0 %880
    %v882 = vsel %vm209, %v866, 0.0
    %883 = vadd.xlane.f32.xlu0 %v882
    %v884 = vpop.xlane.xlu0 %883
    %v885 = vsel %vm209, %v868, 0.0
    %886 = vadd.xlane.f32.xlu0 %v885
    %v887 = vpop.xlane.xlu0 %886
    %v888 = vsel %vm209, %v870, 0.0
    %889 = vadd.xlane.f32.xlu0 %v888
    %v890 = vpop.xlane.xlu0 %889
    %v891 = vsel %vm209, %v872, 0.0
    %892 = vadd.xlane.f32.xlu0 %v891
    %v893 = vpop.xlane.xlu0 %892
    %v894 = vsel %vm209, %v874, 0.0
    %895 = vadd.xlane.f32.xlu0 %v894
    %v896 = vpop.xlane.xlu0 %895
    %v897 = vsel %vm209, %v876, 0.0
    %898 = vadd.xlane.f32.xlu0 %v897
    %v899 = vpop.xlane.xlu0 %898
    %v900 = vsel %vm209, %v878, 0.0
    %901 = vadd.xlane.f32.xlu0 %v900
    %v902 = vpop.xlane.xlu0 %901
    %v903 = vrcp.pop %v881
    %v904 = vmul.f32 %v864, %v903
    %v905 = vrcp.pop %v884
    %v906 = vmul.f32 %v866, %v905
    %v907 = vrcp.pop %v887
    %v908 = vmul.f32 %v868, %v907
    %v909 = vrcp.pop %v890
    %v910 = vmul.f32 %v870, %v909
    %v911 = vrcp.pop %v893
    %v912 = vmul.f32 %v872, %v911
    %v913 = vrcp.pop %v896
    %v914 = vmul.f32 %v874, %v913
    %v915 = vrcp.pop %v899
    %v916 = vmul.f32 %v876, %v915
    %v917 = vrcp.pop %v902
    %v918 = vmul.f32 %v878, %v917
    %919 = vrot.lane.b32.xlu0 %v196, 64
    %v920 = vpop.permute.xlu0 %919
    %v923 = vsel %vm209, %v904, 0
    %925 = vmatprep.subr.mxu0 0.0
    %926 = vmatpush1.msra.mxu0 %v920
    %927 = vmatprep.subr.mxu0 0.0
    %928 = vmatpush1.msra.mxu0 0.0
    %929 = vmatprep.subr.mxu0 0.0
    %930 = vmatpush1.msra.mxu0 0.0
    %931 = vmatprep.subr.mxu0 0.0
    %932 = vmatpush1.msra.mxu0 0.0
    %933 = vmatprep.subr.mxu0 0.0
    %934 = vmatpush1.msra.mxu0 0.0
    %935 = vmatprep.subr.mxu0 0.0
    %936 = vmatpush1.msra.mxu0 0.0
    %937 = vmatprep.subr.mxu0 0.0
    %938 = vmatpush1.msra.mxu0 0.0
    %939 = vmatprep.subr.mxu0 0.0
    %940 = vmatpush1.msra.mxu0 0.0
    %941 = vmatprep.subr.mxu0 0.0
    %942 = vmatpush1.msra.mxu0 0.0
    %943 = vmatprep.subr.mxu0 0.0
    %944 = vmatpush1.msra.mxu0 0.0
    %945 = vmatprep.subr.mxu0 0.0
    %946 = vmatpush1.msra.mxu0 0.0
    %947 = vmatprep.subr.mxu0 0.0
    %948 = vmatpush1.msra.mxu0 0.0
    %949 = vmatprep.subr.mxu0 0.0
    %950 = vmatpush1.msra.mxu0 0.0
    %951 = vmatprep.subr.mxu0 0.0
    %952 = vmatpush1.msra.mxu0 0.0
    %953 = vmatprep.subr.mxu0 0.0
    %954 = vmatpush1.msra.mxu0 0.0
    %955 = vmatprep.subr.mxu0 0.0
    %956 = vmatpush1.msra.mxu0 0.0
    %957 = vmatprep.subr.mxu0 0.0
    %958 = vmatpush1.msra.mxu0 0.0
    %959 = vmatprep.subr.mxu0 0.0
    %960 = vmatpush1.msra.mxu0 0.0
    %961 = vmatprep.subr.mxu0 0.0
    %962 = vmatpush1.msra.mxu0 0.0
    %963 = vmatprep.subr.mxu0 0.0
    %964 = vmatpush1.msra.mxu0 0.0
    %965 = vmatprep.subr.mxu0 0.0
    %966 = vmatpush1.msra.mxu0 0.0
    %967 = vmatprep.subr.mxu0 0.0
    %968 = vmatpush1.msra.mxu0 0.0
    %969 = vmatprep.subr.mxu0 0.0
    %970 = vmatpush1.msra.mxu0 0.0
    %971 = vmatprep.subr.mxu0 0.0
    %972 = vmatpush1.msra.mxu0 0.0
    %973 = vmatprep.subr.mxu0 0.0
    %974 = vmatpush1.msra.mxu0 0.0
    %975 = vmatprep.subr.mxu0 0.0
    %976 = vmatpush1.msra.mxu0 0.0
    %977 = vmatprep.subr.mxu0 0.0
    %978 = vmatpush1.msra.mxu0 0.0
    %979 = vmatprep.subr.mxu0 0.0
    %980 = vmatpush1.msra.mxu0 0.0
    %981 = vmatprep.subr.mxu0 0.0
    %982 = vmatpush1.msra.mxu0 0.0
    %983 = vmatprep.subr.mxu0 0.0
    %984 = vmatpush1.msra.mxu0 0.0
    %985 = vmatprep.subr.mxu0 0.0
    %986 = vmatpush1.msra.mxu0 0.0
    %987 = vmatprep.subr.mxu0 0.0
    %988 = vmatpush1.msra.mxu0 0.0
    %989 = vmatprep.mubr.f32.mxu0 0.0
    %990 = vmatmul.mubr.f32.gmra.mrb[0].mxu0 %v923
    %v991 = vpop.f32.mrb[0].mxu0
    %v992 = vadd.f32 0.0, %v991
    %v993 = vpop.f32.mrb[0].mxu0
    %994 = vdwg.mxu0
    %995 = vrot.lane.b32.xlu0 %v196, 56
    %v996 = vpop.permute.xlu0 %995
    %v999 = vsel %vm209, %v906, 0
    %1001 = vmatprep.subr.mxu0 0.0
    %1002 = vmatpush1.msra.mxu0 %v996
    %1003 = vmatprep.subr.mxu0 0.0
    %1004 = vmatpush1.msra.mxu0 0.0
    %1005 = vmatprep.subr.mxu0 0.0
    %1006 = vmatpush1.msra.mxu0 0.0
    %1007 = vmatprep.subr.mxu0 0.0
    %1008 = vmatpush1.msra.mxu0 0.0
    %1009 = vmatprep.subr.mxu0 0.0
    %1010 = vmatpush1.msra.mxu0 0.0
    %1011 = vmatprep.subr.mxu0 0.0
    %1012 = vmatpush1.msra.mxu0 0.0
    %1013 = vmatprep.subr.mxu0 0.0
    %1014 = vmatpush1.msra.mxu0 0.0
    %1015 = vmatprep.subr.mxu0 0.0
    %1016 = vmatpush1.msra.mxu0 0.0
    %1017 = vmatprep.subr.mxu0 0.0
    %1018 = vmatpush1.msra.mxu0 0.0
    %1019 = vmatprep.subr.mxu0 0.0
    %1020 = vmatpush1.msra.mxu0 0.0
    %1021 = vmatprep.subr.mxu0 0.0
    %1022 = vmatpush1.msra.mxu0 0.0
    %1023 = vmatprep.subr.mxu0 0.0
    %1024 = vmatpush1.msra.mxu0 0.0
    %1025 = vmatprep.subr.mxu0 0.0
    %1026 = vmatpush1.msra.mxu0 0.0
    %1027 = vmatprep.subr.mxu0 0.0
    %1028 = vmatpush1.msra.mxu0 0.0
    %1029 = vmatprep.subr.mxu0 0.0
    %1030 = vmatpush1.msra.mxu0 0.0
    %1031 = vmatprep.subr.mxu0 0.0
    %1032 = vmatpush1.msra.mxu0 0.0
    %1033 = vmatprep.subr.mxu0 0.0
    %1034 = vmatpush1.msra.mxu0 0.0
    %1035 = vmatprep.subr.mxu0 0.0
    %1036 = vmatpush1.msra.mxu0 0.0
    %1037 = vmatprep.subr.mxu0 0.0
    %1038 = vmatpush1.msra.mxu0 0.0
    %1039 = vmatprep.subr.mxu0 0.0
    %1040 = vmatpush1.msra.mxu0 0.0
    %1041 = vmatprep.subr.mxu0 0.0
    %1042 = vmatpush1.msra.mxu0 0.0
    %1043 = vmatprep.subr.mxu0 0.0
    %1044 = vmatpush1.msra.mxu0 0.0
    %1045 = vmatprep.subr.mxu0 0.0
    %1046 = vmatpush1.msra.mxu0 0.0
    %1047 = vmatprep.subr.mxu0 0.0
    %1048 = vmatpush1.msra.mxu0 0.0
    %1049 = vmatprep.subr.mxu0 0.0
    %1050 = vmatpush1.msra.mxu0 0.0
    %1051 = vmatprep.subr.mxu0 0.0
    %1052 = vmatpush1.msra.mxu0 0.0
    %1053 = vmatprep.subr.mxu0 0.0
    %1054 = vmatpush1.msra.mxu0 0.0
    %1055 = vmatprep.subr.mxu0 0.0
    %1056 = vmatpush1.msra.mxu0 0.0
    %1057 = vmatprep.subr.mxu0 0.0
    %1058 = vmatpush1.msra.mxu0 0.0
    %1059 = vmatprep.subr.mxu0 0.0
    %1060 = vmatpush1.msra.mxu0 0.0
    %1061 = vmatprep.subr.mxu0 0.0
    %1062 = vmatpush1.msra.mxu0 0.0
    %1063 = vmatprep.subr.mxu0 0.0
    %1064 = vmatpush1.msra.mxu0 0.0
    %1065 = vmatprep.mubr.f32.mxu0 0.0
    %1066 = vmatmul.mubr.f32.gmra.mrb[0].mxu0 %v999
    %v1067 = vpop.f32.mrb[0].mxu0
    %v1068 = vadd.f32 0.0, %v1067
    %v1069 = vpop.f32.mrb[0].mxu0
    %1070 = vdwg.mxu0
    %1071 = vrot.lane.b32.xlu0 %v196, 48
    %v1072 = vpop.permute.xlu0 %1071
    %v1075 = vsel %vm209, %v908, 0
    %1077 = vmatprep.subr.mxu0 0.0
    %1078 = vmatpush1.msra.mxu0 %v1072
    %1079 = vmatprep.subr.mxu0 0.0
    %1080 = vmatpush1.msra.mxu0 0.0
    %1081 = vmatprep.subr.mxu0 0.0
    %1082 = vmatpush1.msra.mxu0 0.0
    %1083 = vmatprep.subr.mxu0 0.0
    %1084 = vmatpush1.msra.mxu0 0.0
    %1085 = vmatprep.subr.mxu0 0.0
    %1086 = vmatpush1.msra.mxu0 0.0
    %1087 = vmatprep.subr.mxu0 0.0
    %1088 = vmatpush1.msra.mxu0 0.0
    %1089 = vmatprep.subr.mxu0 0.0
    %1090 = vmatpush1.msra.mxu0 0.0
    %1091 = vmatprep.subr.mxu0 0.0
    %1092 = vmatpush1.msra.mxu0 0.0
    %1093 = vmatprep.subr.mxu0 0.0
    %1094 = vmatpush1.msra.mxu0 0.0
    %1095 = vmatprep.subr.mxu0 0.0
    %1096 = vmatpush1.msra.mxu0 0.0
    %1097 = vmatprep.subr.mxu0 0.0
    %1098 = vmatpush1.msra.mxu0 0.0
    %1099 = vmatprep.subr.mxu0 0.0
    %1100 = vmatpush1.msra.mxu0 0.0
    %1101 = vmatprep.subr.mxu0 0.0
    %1102 = vmatpush1.msra.mxu0 0.0
    %1103 = vmatprep.subr.mxu0 0.0
    %1104 = vmatpush1.msra.mxu0 0.0
    %1105 = vmatprep.subr.mxu0 0.0
    %1106 = vmatpush1.msra.mxu0 0.0
    %1107 = vmatprep.subr.mxu0 0.0
    %1108 = vmatpush1.msra.mxu0 0.0
    %1109 = vmatprep.subr.mxu0 0.0
    %1110 = vmatpush1.msra.mxu0 0.0
    %1111 = vmatprep.subr.mxu0 0.0
    %1112 = vmatpush1.msra.mxu0 0.0
    %1113 = vmatprep.subr.mxu0 0.0
    %1114 = vmatpush1.msra.mxu0 0.0
    %1115 = vmatprep.subr.mxu0 0.0
    %1116 = vmatpush1.msra.mxu0 0.0
    %1117 = vmatprep.subr.mxu0 0.0
    %1118 = vmatpush1.msra.mxu0 0.0
    %1119 = vmatprep.subr.mxu0 0.0
    %1120 = vmatpush1.msra.mxu0 0.0
    %1121 = vmatprep.subr.mxu0 0.0
    %1122 = vmatpush1.msra.mxu0 0.0
    %1123 = vmatprep.subr.mxu0 0.0
    %1124 = vmatpush1.msra.mxu0 0.0
    %1125 = vmatprep.subr.mxu0 0.0
    %1126 = vmatpush1.msra.mxu0 0.0
    %1127 = vmatprep.subr.mxu0 0.0
    %1128 = vmatpush1.msra.mxu0 0.0
    %1129 = vmatprep.subr.mxu0 0.0
    %1130 = vmatpush1.msra.mxu0 0.0
    %1131 = vmatprep.subr.mxu0 0.0
    %1132 = vmatpush1.msra.mxu0 0.0
    %1133 = vmatprep.subr.mxu0 0.0
    %1134 = vmatpush1.msra.mxu0 0.0
    %1135 = vmatprep.subr.mxu0 0.0
    %1136 = vmatpush1.msra.mxu0 0.0
    %1137 = vmatprep.subr.mxu0 0.0
    %1138 = vmatpush1.msra.mxu0 0.0
    %1139 = vmatprep.subr.mxu0 0.0
    %1140 = vmatpush1.msra.mxu0 0.0
    %1141 = vmatprep.mubr.f32.mxu0 0.0
    %1142 = vmatmul.mubr.f32.gmra.mrb[0].mxu0 %v1075
    %v1143 = vpop.f32.mrb[0].mxu0
    %v1144 = vadd.f32 0.0, %v1143
    %v1145 = vpop.f32.mrb[0].mxu0
    %1146 = vdwg.mxu0
    %1147 = vrot.lane.b32.xlu0 %v196, 40
    %v1148 = vpop.permute.xlu0 %1147
    %v1151 = vsel %vm209, %v910, 0
    %1153 = vmatprep.subr.mxu0 0.0
    %1154 = vmatpush1.msra.mxu0 %v1148
    %1155 = vmatprep.subr.mxu0 0.0
    %1156 = vmatpush1.msra.mxu0 0.0
    %1157 = vmatprep.subr.mxu0 0.0
    %1158 = vmatpush1.msra.mxu0 0.0
    %1159 = vmatprep.subr.mxu0 0.0
    %1160 = vmatpush1.msra.mxu0 0.0
    %1161 = vmatprep.subr.mxu0 0.0
    %1162 = vmatpush1.msra.mxu0 0.0
    %1163 = vmatprep.subr.mxu0 0.0
    %1164 = vmatpush1.msra.mxu0 0.0
    %1165 = vmatprep.subr.mxu0 0.0
    %1166 = vmatpush1.msra.mxu0 0.0
    %1167 = vmatprep.subr.mxu0 0.0
    %1168 = vmatpush1.msra.mxu0 0.0
    %1169 = vmatprep.subr.mxu0 0.0
    %1170 = vmatpush1.msra.mxu0 0.0
    %1171 = vmatprep.subr.mxu0 0.0
    %1172 = vmatpush1.msra.mxu0 0.0
    %1173 = vmatprep.subr.mxu0 0.0
    %1174 = vmatpush1.msra.mxu0 0.0
    %1175 = vmatprep.subr.mxu0 0.0
    %1176 = vmatpush1.msra.mxu0 0.0
    %1177 = vmatprep.subr.mxu0 0.0
    %1178 = vmatpush1.msra.mxu0 0.0
    %1179 = vmatprep.subr.mxu0 0.0
    %1180 = vmatpush1.msra.mxu0 0.0
    %1181 = vmatprep.subr.mxu0 0.0
    %1182 = vmatpush1.msra.mxu0 0.0
    %1183 = vmatprep.subr.mxu0 0.0
    %1184 = vmatpush1.msra.mxu0 0.0
    %1185 = vmatprep.subr.mxu0 0.0
    %1186 = vmatpush1.msra.mxu0 0.0
    %1187 = vmatprep.subr.mxu0 0.0
    %1188 = vmatpush1.msra.mxu0 0.0
    %1189 = vmatprep.subr.mxu0 0.0
    %1190 = vmatpush1.msra.mxu0 0.0
    %1191 = vmatprep.subr.mxu0 0.0
    %1192 = vmatpush1.msra.mxu0 0.0
    %1193 = vmatprep.subr.mxu0 0.0
    %1194 = vmatpush1.msra.mxu0 0.0
    %1195 = vmatprep.subr.mxu0 0.0
    %1196 = vmatpush1.msra.mxu0 0.0
    %1197 = vmatprep.subr.mxu0 0.0
    %1198 = vmatpush1.msra.mxu0 0.0
    %1199 = vmatprep.subr.mxu0 0.0
    %1200 = vmatpush1.msra.mxu0 0.0
    %1201 = vmatprep.subr.mxu0 0.0
    %1202 = vmatpush1.msra.mxu0 0.0
    %1203 = vmatprep.subr.mxu0 0.0
    %1204 = vmatpush1.msra.mxu0 0.0
    %1205 = vmatprep.subr.mxu0 0.0
    %1206 = vmatpush1.msra.mxu0 0.0
    %1207 = vmatprep.subr.mxu0 0.0
    %1208 = vmatpush1.msra.mxu0 0.0
    %1209 = vmatprep.subr.mxu0 0.0
    %1210 = vmatpush1.msra.mxu0 0.0
    %1211 = vmatprep.subr.mxu0 0.0
    %1212 = vmatpush1.msra.mxu0 0.0
    %1213 = vmatprep.subr.mxu0 0.0
    %1214 = vmatpush1.msra.mxu0 0.0
    %1215 = vmatprep.subr.mxu0 0.0
    %1216 = vmatpush1.msra.mxu0 0.0
    %1217 = vmatprep.mubr.f32.mxu0 0.0
    %1218 = vmatmul.mubr.f32.gmra.mrb[0].mxu0 %v1151
    %v1219 = vpop.f32.mrb[0].mxu0
    %v1220 = vadd.f32 0.0, %v1219
    %v1221 = vpop.f32.mrb[0].mxu0
    %1222 = vdwg.mxu0
    %1224 = vrot.lane.b32.xlu0 %v1068, 8
    %v1225 = vpop.permute.xlu0 %1224
    %1228 = vrot.lane.b32.xlu0 %v1144, 16
    %v1229 = vpop.permute.xlu0 %1228
    %1232 = vrot.lane.b32.xlu0 %v1220, 24
    %v1233 = vpop.permute.xlu0 %1232
    %v1235 = vsel %vm209, %v992, %v1225
    %vm1236 = vcmask 130048
    %v1237 = vsel %vm1236, %v1235, %v1229
    %vm1238 = vcmask 195584
    %v1239 = vsel %vm1238, %v1237, %v1233
    %1240 = vrot.lane.b32.xlu0 %v201, 64
    %v1241 = vpop.permute.xlu0 %1240
    %v1244 = vsel %vm209, %v912, 0
    %1246 = vmatprep.subr.mxu0 0.0
    %1247 = vmatpush1.msra.mxu0 %v1241
    %1248 = vmatprep.subr.mxu0 0.0
    %1249 = vmatpush1.msra.mxu0 0.0
    %1250 = vmatprep.subr.mxu0 0.0
    %1251 = vmatpush1.msra.mxu0 0.0
    %1252 = vmatprep.subr.mxu0 0.0
    %1253 = vmatpush1.msra.mxu0 0.0
    %1254 = vmatprep.subr.mxu0 0.0
    %1255 = vmatpush1.msra.mxu0 0.0
    %1256 = vmatprep.subr.mxu0 0.0
    %1257 = vmatpush1.msra.mxu0 0.0
    %1258 = vmatprep.subr.mxu0 0.0
    %1259 = vmatpush1.msra.mxu0 0.0
    %1260 = vmatprep.subr.mxu0 0.0
    %1261 = vmatpush1.msra.mxu0 0.0
    %1262 = vmatprep.subr.mxu0 0.0
    %1263 = vmatpush1.msra.mxu0 0.0
    %1264 = vmatprep.subr.mxu0 0.0
    %1265 = vmatpush1.msra.mxu0 0.0
    %1266 = vmatprep.subr.mxu0 0.0
    %1267 = vmatpush1.msra.mxu0 0.0
    %1268 = vmatprep.subr.mxu0 0.0
    %1269 = vmatpush1.msra.mxu0 0.0
    %1270 = vmatprep.subr.mxu0 0.0
    %1271 = vmatpush1.msra.mxu0 0.0
    %1272 = vmatprep.subr.mxu0 0.0
    %1273 = vmatpush1.msra.mxu0 0.0
    %1274 = vmatprep.subr.mxu0 0.0
    %1275 = vmatpush1.msra.mxu0 0.0
    %1276 = vmatprep.subr.mxu0 0.0
    %1277 = vmatpush1.msra.mxu0 0.0
    %1278 = vmatprep.subr.mxu0 0.0
    %1279 = vmatpush1.msra.mxu0 0.0
    %1280 = vmatprep.subr.mxu0 0.0
    %1281 = vmatpush1.msra.mxu0 0.0
    %1282 = vmatprep.subr.mxu0 0.0
    %1283 = vmatpush1.msra.mxu0 0.0
    %1284 = vmatprep.subr.mxu0 0.0
    %1285 = vmatpush1.msra.mxu0 0.0
    %1286 = vmatprep.subr.mxu0 0.0
    %1287 = vmatpush1.msra.mxu0 0.0
    %1288 = vmatprep.subr.mxu0 0.0
    %1289 = vmatpush1.msra.mxu0 0.0
    %1290 = vmatprep.subr.mxu0 0.0
    %1291 = vmatpush1.msra.mxu0 0.0
    %1292 = vmatprep.subr.mxu0 0.0
    %1293 = vmatpush1.msra.mxu0 0.0
    %1294 = vmatprep.subr.mxu0 0.0
    %1295 = vmatpush1.msra.mxu0 0.0
    %1296 = vmatprep.subr.mxu0 0.0
    %1297 = vmatpush1.msra.mxu0 0.0
    %1298 = vmatprep.subr.mxu0 0.0
    %1299 = vmatpush1.msra.mxu0 0.0
    %1300 = vmatprep.subr.mxu0 0.0
    %1301 = vmatpush1.msra.mxu0 0.0
    %1302 = vmatprep.subr.mxu0 0.0
    %1303 = vmatpush1.msra.mxu0 0.0
    %1304 = vmatprep.subr.mxu0 0.0
    %1305 = vmatpush1.msra.mxu0 0.0
    %1306 = vmatprep.subr.mxu0 0.0
    %1307 = vmatpush1.msra.mxu0 0.0
    %1308 = vmatprep.subr.mxu0 0.0
    %1309 = vmatpush1.msra.mxu0 0.0
    %1310 = vmatprep.mubr.f32.mxu0 0.0
    %1311 = vmatmul.mubr.f32.gmra.mrb[0].mxu0 %v1244
    %v1312 = vpop.f32.mrb[0].mxu0
    %v1313 = vadd.f32 0.0, %v1312
    %v1314 = vpop.f32.mrb[0].mxu0
    %1315 = vdwg.mxu0
    %1316 = vrot.lane.b32.xlu0 %v201, 56
    %v1317 = vpop.permute.xlu0 %1316
    %v1320 = vsel %vm209, %v914, 0
    %1322 = vmatprep.subr.mxu0 0.0
    %1323 = vmatpush1.msra.mxu0 %v1317
    %1324 = vmatprep.subr.mxu0 0.0
    %1325 = vmatpush1.msra.mxu0 0.0
    %1326 = vmatprep.subr.mxu0 0.0
    %1327 = vmatpush1.msra.mxu0 0.0
    %1328 = vmatprep.subr.mxu0 0.0
    %1329 = vmatpush1.msra.mxu0 0.0
    %1330 = vmatprep.subr.mxu0 0.0
    %1331 = vmatpush1.msra.mxu0 0.0
    %1332 = vmatprep.subr.mxu0 0.0
    %1333 = vmatpush1.msra.mxu0 0.0
    %1334 = vmatprep.subr.mxu0 0.0
    %1335 = vmatpush1.msra.mxu0 0.0
    %1336 = vmatprep.subr.mxu0 0.0
    %1337 = vmatpush1.msra.mxu0 0.0
    %1338 = vmatprep.subr.mxu0 0.0
    %1339 = vmatpush1.msra.mxu0 0.0
    %1340 = vmatprep.subr.mxu0 0.0
    %1341 = vmatpush1.msra.mxu0 0.0
    %1342 = vmatprep.subr.mxu0 0.0
    %1343 = vmatpush1.msra.mxu0 0.0
    %1344 = vmatprep.subr.mxu0 0.0
    %1345 = vmatpush1.msra.mxu0 0.0
    %1346 = vmatprep.subr.mxu0 0.0
    %1347 = vmatpush1.msra.mxu0 0.0
    %1348 = vmatprep.subr.mxu0 0.0
    %1349 = vmatpush1.msra.mxu0 0.0
    %1350 = vmatprep.subr.mxu0 0.0
    %1351 = vmatpush1.msra.mxu0 0.0
    %1352 = vmatprep.subr.mxu0 0.0
    %1353 = vmatpush1.msra.mxu0 0.0
    %1354 = vmatprep.subr.mxu0 0.0
    %1355 = vmatpush1.msra.mxu0 0.0
    %1356 = vmatprep.subr.mxu0 0.0
    %1357 = vmatpush1.msra.mxu0 0.0
    %1358 = vmatprep.subr.mxu0 0.0
    %1359 = vmatpush1.msra.mxu0 0.0
    %1360 = vmatprep.subr.mxu0 0.0
    %1361 = vmatpush1.msra.mxu0 0.0
    %1362 = vmatprep.subr.mxu0 0.0
    %1363 = vmatpush1.msra.mxu0 0.0
    %1364 = vmatprep.subr.mxu0 0.0
    %1365 = vmatpush1.msra.mxu0 0.0
    %1366 = vmatprep.subr.mxu0 0.0
    %1367 = vmatpush1.msra.mxu0 0.0
    %1368 = vmatprep.subr.mxu0 0.0
    %1369 = vmatpush1.msra.mxu0 0.0
    %1370 = vmatprep.subr.mxu0 0.0
    %1371 = vmatpush1.msra.mxu0 0.0
    %1372 = vmatprep.subr.mxu0 0.0
    %1373 = vmatpush1.msra.mxu0 0.0
    %1374 = vmatprep.subr.mxu0 0.0
    %1375 = vmatpush1.msra.mxu0 0.0
    %1376 = vmatprep.subr.mxu0 0.0
    %1377 = vmatpush1.msra.mxu0 0.0
    %1378 = vmatprep.subr.mxu0 0.0
    %1379 = vmatpush1.msra.mxu0 0.0
    %1380 = vmatprep.subr.mxu0 0.0
    %1381 = vmatpush1.msra.mxu0 0.0
    %1382 = vmatprep.subr.mxu0 0.0
    %1383 = vmatpush1.msra.mxu0 0.0
    %1384 = vmatprep.subr.mxu0 0.0
    %1385 = vmatpush1.msra.mxu0 0.0
    %1386 = vmatprep.mubr.f32.mxu0 0.0
    %1387 = vmatmul.mubr.f32.gmra.mrb[0].mxu0 %v1320
    %v1388 = vpop.f32.mrb[0].mxu0
    %v1389 = vadd.f32 0.0, %v1388
    %v1390 = vpop.f32.mrb[0].mxu0
    %1391 = vdwg.mxu0
    %1392 = vrot.lane.b32.xlu0 %v201, 48
    %v1393 = vpop.permute.xlu0 %1392
    %v1396 = vsel %vm209, %v916, 0
    %1398 = vmatprep.subr.mxu0 0.0
    %1399 = vmatpush1.msra.mxu0 %v1393
    %1400 = vmatprep.subr.mxu0 0.0
    %1401 = vmatpush1.msra.mxu0 0.0
    %1402 = vmatprep.subr.mxu0 0.0
    %1403 = vmatpush1.msra.mxu0 0.0
    %1404 = vmatprep.subr.mxu0 0.0
    %1405 = vmatpush1.msra.mxu0 0.0
    %1406 = vmatprep.subr.mxu0 0.0
    %1407 = vmatpush1.msra.mxu0 0.0
    %1408 = vmatprep.subr.mxu0 0.0
    %1409 = vmatpush1.msra.mxu0 0.0
    %1410 = vmatprep.subr.mxu0 0.0
    %1411 = vmatpush1.msra.mxu0 0.0
    %1412 = vmatprep.subr.mxu0 0.0
    %1413 = vmatpush1.msra.mxu0 0.0
    %1414 = vmatprep.subr.mxu0 0.0
    %1415 = vmatpush1.msra.mxu0 0.0
    %1416 = vmatprep.subr.mxu0 0.0
    %1417 = vmatpush1.msra.mxu0 0.0
    %1418 = vmatprep.subr.mxu0 0.0
    %1419 = vmatpush1.msra.mxu0 0.0
    %1420 = vmatprep.subr.mxu0 0.0
    %1421 = vmatpush1.msra.mxu0 0.0
    %1422 = vmatprep.subr.mxu0 0.0
    %1423 = vmatpush1.msra.mxu0 0.0
    %1424 = vmatprep.subr.mxu0 0.0
    %1425 = vmatpush1.msra.mxu0 0.0
    %1426 = vmatprep.subr.mxu0 0.0
    %1427 = vmatpush1.msra.mxu0 0.0
    %1428 = vmatprep.subr.mxu0 0.0
    %1429 = vmatpush1.msra.mxu0 0.0
    %1430 = vmatprep.subr.mxu0 0.0
    %1431 = vmatpush1.msra.mxu0 0.0
    %1432 = vmatprep.subr.mxu0 0.0
    %1433 = vmatpush1.msra.mxu0 0.0
    %1434 = vmatprep.subr.mxu0 0.0
    %1435 = vmatpush1.msra.mxu0 0.0
    %1436 = vmatprep.subr.mxu0 0.0
    %1437 = vmatpush1.msra.mxu0 0.0
    %1438 = vmatprep.subr.mxu0 0.0
    %1439 = vmatpush1.msra.mxu0 0.0
    %1440 = vmatprep.subr.mxu0 0.0
    %1441 = vmatpush1.msra.mxu0 0.0
    %1442 = vmatprep.subr.mxu0 0.0
    %1443 = vmatpush1.msra.mxu0 0.0
    %1444 = vmatprep.subr.mxu0 0.0
    %1445 = vmatpush1.msra.mxu0 0.0
    %1446 = vmatprep.subr.mxu0 0.0
    %1447 = vmatpush1.msra.mxu0 0.0
    %1448 = vmatprep.subr.mxu0 0.0
    %1449 = vmatpush1.msra.mxu0 0.0
    %1450 = vmatprep.subr.mxu0 0.0
    %1451 = vmatpush1.msra.mxu0 0.0
    %1452 = vmatprep.subr.mxu0 0.0
    %1453 = vmatpush1.msra.mxu0 0.0
    %1454 = vmatprep.subr.mxu0 0.0
    %1455 = vmatpush1.msra.mxu0 0.0
    %1456 = vmatprep.subr.mxu0 0.0
    %1457 = vmatpush1.msra.mxu0 0.0
    %1458 = vmatprep.subr.mxu0 0.0
    %1459 = vmatpush1.msra.mxu0 0.0
    %1460 = vmatprep.subr.mxu0 0.0
    %1461 = vmatpush1.msra.mxu0 0.0
    %1462 = vmatprep.mubr.f32.mxu0 0.0
    %1463 = vmatmul.mubr.f32.gmra.mrb[0].mxu0 %v1396
    %v1464 = vpop.f32.mrb[0].mxu0
    %v1465 = vadd.f32 0.0, %v1464
    %v1466 = vpop.f32.mrb[0].mxu0
    %1467 = vdwg.mxu0
    %1468 = vrot.lane.b32.xlu0 %v201, 40
    %v1469 = vpop.permute.xlu0 %1468
    %v1472 = vsel %vm209, %v918, 0
    %1474 = vmatprep.subr.mxu0 0.0
    %1475 = vmatpush1.msra.mxu0 %v1469
    %1476 = vmatprep.subr.mxu0 0.0
    %1477 = vmatpush1.msra.mxu0 0.0
    %1478 = vmatprep.subr.mxu0 0.0
    %1479 = vmatpush1.msra.mxu0 0.0
    %1480 = vmatprep.subr.mxu0 0.0
    %1481 = vmatpush1.msra.mxu0 0.0
    %1482 = vmatprep.subr.mxu0 0.0
    %1483 = vmatpush1.msra.mxu0 0.0
    %1484 = vmatprep.subr.mxu0 0.0
    %1485 = vmatpush1.msra.mxu0 0.0
    %1486 = vmatprep.subr.mxu0 0.0
    %1487 = vmatpush1.msra.mxu0 0.0
    %1488 = vmatprep.subr.mxu0 0.0
    %1489 = vmatpush1.msra.mxu0 0.0
    %1490 = vmatprep.subr.mxu0 0.0
    %1491 = vmatpush1.msra.mxu0 0.0
    %1492 = vmatprep.subr.mxu0 0.0
    %1493 = vmatpush1.msra.mxu0 0.0
    %1494 = vmatprep.subr.mxu0 0.0
    %1495 = vmatpush1.msra.mxu0 0.0
    %1496 = vmatprep.subr.mxu0 0.0
    %1497 = vmatpush1.msra.mxu0 0.0
    %1498 = vmatprep.subr.mxu0 0.0
    %1499 = vmatpush1.msra.mxu0 0.0
    %1500 = vmatprep.subr.mxu0 0.0
    %1501 = vmatpush1.msra.mxu0 0.0
    %1502 = vmatprep.subr.mxu0 0.0
    %1503 = vmatpush1.msra.mxu0 0.0
    %1504 = vmatprep.subr.mxu0 0.0
    %1505 = vmatpush1.msra.mxu0 0.0
    %1506 = vmatprep.subr.mxu0 0.0
    %1507 = vmatpush1.msra.mxu0 0.0
    %1508 = vmatprep.subr.mxu0 0.0
    %1509 = vmatpush1.msra.mxu0 0.0
    %1510 = vmatprep.subr.mxu0 0.0
    %1511 = vmatpush1.msra.mxu0 0.0
    %1512 = vmatprep.subr.mxu0 0.0
    %1513 = vmatpush1.msra.mxu0 0.0
    %1514 = vmatprep.subr.mxu0 0.0
    %1515 = vmatpush1.msra.mxu0 0.0
    %1516 = vmatprep.subr.mxu0 0.0
    %1517 = vmatpush1.msra.mxu0 0.0
    %1518 = vmatprep.subr.mxu0 0.0
    %1519 = vmatpush1.msra.mxu0 0.0
    %1520 = vmatprep.subr.mxu0 0.0
    %1521 = vmatpush1.msra.mxu0 0.0
    %1522 = vmatprep.subr.mxu0 0.0
    %1523 = vmatpush1.msra.mxu0 0.0
    %1524 = vmatprep.subr.mxu0 0.0
    %1525 = vmatpush1.msra.mxu0 0.0
    %1526 = vmatprep.subr.mxu0 0.0
    %1527 = vmatpush1.msra.mxu0 0.0
    %1528 = vmatprep.subr.mxu0 0.0
    %1529 = vmatpush1.msra.mxu0 0.0
    %1530 = vmatprep.subr.mxu0 0.0
    %1531 = vmatpush1.msra.mxu0 0.0
    %1532 = vmatprep.subr.mxu0 0.0
    %1533 = vmatpush1.msra.mxu0 0.0
    %1534 = vmatprep.subr.mxu0 0.0
    %1535 = vmatpush1.msra.mxu0 0.0
    %1536 = vmatprep.subr.mxu0 0.0
    %1537 = vmatpush1.msra.mxu0 0.0
    %1538 = vmatprep.mubr.f32.mxu0 0.0
    %1539 = vmatmul.mubr.f32.gmra.mrb[0].mxu0 %v1472
    %v1540 = vpop.f32.mrb[0].mxu0
    %v1541 = vadd.f32 0.0, %v1540
    %v1542 = vpop.f32.mrb[0].mxu0
    %1543 = vdwg.mxu0
    %1545 = vrot.lane.b32.xlu0 %v1389, 8
    %v1546 = vpop.permute.xlu0 %1545
    %1549 = vrot.lane.b32.xlu0 %v1465, 16
    %v1550 = vpop.permute.xlu0 %1549
    %1553 = vrot.lane.b32.xlu0 %v1541, 24
    %v1554 = vpop.permute.xlu0 %1553
    %v1556 = vsel %vm209, %v1313, %v1546
    %v1557 = vsel %vm1236, %v1556, %v1550
    %v1558 = vsel %vm1238, %v1557, %v1554
    %v1559 = vld [vmem:[#allocation7] sm:$0xff]
    %v1560 = vld [vmem:[#allocation7 + $0x8] sm:$0xff]
    %v1561 = vld [vmem:[#allocation7 + $0x10] sm:$0xff]
    %v1562 = vld [vmem:[#allocation7 + $0x18] sm:$0xff]
    %v1563 = vld [vmem:[%s4] sm:$0x1]
    %v1565 = vlaneseq
    %v1566 = vshrl.u32 %v1565, 7
    %v1567 = vsub.s32 0, %v1566
    %v1568 = vrot.slane %v1563, %v1567
    %v1571 = vsel %vm124, %v1239, 0
    %v1574 = vsel %vm124, %v1558, 0
    %1576 = vmatprep.subr.mxu0 0.0
    %1577 = vmatpush1.msra.mxu0 %v1559
    %1578 = vmatprep.subr.mxu0 0.0
    %1579 = vmatpush1.msra.mxu0 %v1560
    %1580 = vmatprep.subr.mxu0 0.0
    %1581 = vmatpush1.msra.mxu0 %v1561
    %1582 = vmatprep.subr.mxu0 0.0
    %1583 = vmatpush1.msra.mxu0 %v1562
    %1584 = vmatprep.subr.mxu0 0.0
    %1585 = vmatpush1.msra.mxu0 0.0
    %1586 = vmatprep.subr.mxu0 0.0
    %1587 = vmatpush1.msra.mxu0 0.0
    %1588 = vmatprep.subr.mxu0 0.0
    %1589 = vmatpush1.msra.mxu0 0.0
    %1590 = vmatprep.subr.mxu0 0.0
    %1591 = vmatpush1.msra.mxu0 0.0
    %1592 = vmatprep.subr.mxu0 0.0
    %1593 = vmatpush1.msra.mxu0 0.0
    %1594 = vmatprep.subr.mxu0 0.0
    %1595 = vmatpush1.msra.mxu0 0.0
    %1596 = vmatprep.subr.mxu0 0.0
    %1597 = vmatpush1.msra.mxu0 0.0
    %1598 = vmatprep.subr.mxu0 0.0
    %1599 = vmatpush1.msra.mxu0 0.0
    %1600 = vmatprep.subr.mxu0 0.0
    %1601 = vmatpush1.msra.mxu0 0.0
    %1602 = vmatprep.subr.mxu0 0.0
    %1603 = vmatpush1.msra.mxu0 0.0
    %1604 = vmatprep.subr.mxu0 0.0
    %1605 = vmatpush1.msra.mxu0 0.0
    %1606 = vmatprep.subr.mxu0 0.0
    %1607 = vmatpush1.msra.mxu0 0.0
    %1608 = vmatprep.subr.mxu0 0.0
    %1609 = vmatpush1.msra.mxu0 0.0
    %1610 = vmatprep.subr.mxu0 0.0
    %1611 = vmatpush1.msra.mxu0 0.0
    %1612 = vmatprep.subr.mxu0 0.0
    %1613 = vmatpush1.msra.mxu0 0.0
    %1614 = vmatprep.subr.mxu0 0.0
    %1615 = vmatpush1.msra.mxu0 0.0
    %1616 = vmatprep.subr.mxu0 0.0
    %1617 = vmatpush1.msra.mxu0 0.0
    %1618 = vmatprep.subr.mxu0 0.0
    %1619 = vmatpush1.msra.mxu0 0.0
    %1620 = vmatprep.subr.mxu0 0.0
    %1621 = vmatpush1.msra.mxu0 0.0
    %1622 = vmatprep.subr.mxu0 0.0
    %1623 = vmatpush1.msra.mxu0 0.0
    %1624 = vmatprep.subr.mxu0 0.0
    %1625 = vmatpush1.msra.mxu0 0.0
    %1626 = vmatprep.subr.mxu0 0.0
    %1627 = vmatpush1.msra.mxu0 0.0
    %1628 = vmatprep.subr.mxu0 0.0
    %1629 = vmatpush1.msra.mxu0 0.0
    %1630 = vmatprep.subr.mxu0 0.0
    %1631 = vmatpush1.msra.mxu0 0.0
    %1632 = vmatprep.subr.mxu0 0.0
    %1633 = vmatpush1.msra.mxu0 0.0
    %1634 = vmatprep.subr.mxu0 0.0
    %1635 = vmatpush1.msra.mxu0 0.0
    %1636 = vmatprep.subr.mxu0 0.0
    %1637 = vmatpush1.msra.mxu0 0.0
    %1638 = vmatprep.subr.mxu0 0.0
    %1639 = vmatpush1.msra.mxu0 0.0
    %1640 = vmatprep.mubr.f32.mxu0 0.0
    %1641 = vmatmul.mubr.f32.gmra.mrb[0].mxu0 %v1571
    %v1642 = vpop.f32.mrb[0].mxu0
    %v1643 = vadd.f32 %v1568, %v1642
    %v1644 = vpop.f32.mrb[0].mxu0
    %1645 = vmatprep.mubr.f32.mxu0 0.0
    %1646 = vmatmul.mubr.f32.gmra.mrb[0].mxu0 %v1574
    %v1647 = vpop.f32.mrb[0].mxu0
    %v1648 = vadd.f32 %v1568, %v1647
    %v1649 = vpop.f32.mrb[0].mxu0
    %1650 = vdwg.mxu0
    %v1652 = vcombine.high %v1643, %v1643
    %v1654 = vunpack.c.l.s4 1966171168
    %v1655 = vunpack.c.0.s8 %v1654
    %v1656 = vlaneseq
    %v1657 = vshrl.u32 %v1656, 7
    %v1658 = vsub.s32 %v1655, %v1657
    %v1659 = vrot.slane %v1643, %v1658
    %v1661 = vunpack.c.l.s4 1966171168
    %v1662 = vunpack.c.0.s8 %v1661
    %v1663 = vlaneseq
    %v1664 = vshrl.u32 %v1663, 7
    %v1665 = vsub.s32 %v1662, %v1664
    %v1666 = vrot.slane %v1652, %v1665
    %v1667 = vcombine.high %v1659, %v1659
    %v1668 = vcombine.high %v1666, %v1666
    %v1670 = vunpack.c.l.s4 1966171168
    %v1671 = vunpack.c.0.s8 %v1670
    %v1672 = vlaneseq
    %v1673 = vshrl.u32 %v1672, 7
    %v1674 = vsub.s32 %v1671, %v1673
    %v1675 = vrot.slane %v1659, %v1674
    %v1677 = vunpack.c.l.s4 1966171168
    %v1678 = vunpack.c.0.s8 %v1677
    %v1679 = vlaneseq
    %v1680 = vshrl.u32 %v1679, 7
    %v1681 = vsub.s32 %v1678, %v1680
    %v1682 = vrot.slane %v1666, %v1681
    %v1684 = vunpack.c.l.s4 1966171168
    %v1685 = vunpack.c.0.s8 %v1684
    %v1686 = vlaneseq
    %v1687 = vshrl.u32 %v1686, 7
    %v1688 = vsub.s32 %v1685, %v1687
    %v1689 = vrot.slane %v1667, %v1688
    %v1691 = vunpack.c.l.s4 1966171168
    %v1692 = vunpack.c.0.s8 %v1691
    %v1693 = vlaneseq
    %v1694 = vshrl.u32 %v1693, 7
    %v1695 = vsub.s32 %v1692, %v1694
    %v1696 = vrot.slane %v1668, %v1695
    %v1697 = vcombine.high %v1675, %v1675
    %v1698 = vcombine.high %v1682, %v1682
    %v1699 = vcombine.high %v1689, %v1689
    %v1700 = vcombine.high %v1696, %v1696
    %vm1709 = vcmask 253952
    %1710 = vst.msk [vmem:[#allocation8] sm:$0x1] %vm1709, %v1675
    %1711 = vst.msk [vmem:[#allocation8 + $0x2] sm:$0x1] %vm1709, %v1689
    %1712 = vst.msk [vmem:[#allocation8 + $0x4] sm:$0x1] %vm1709, %v1697
    %1713 = vst.msk [vmem:[#allocation8 + $0x6] sm:$0x1] %vm1709, %v1699
    %1714 = vst.msk [vmem:[#allocation8 + $0x8] sm:$0x1] %vm1709, %v1682
    %1715 = vst.msk [vmem:[#allocation8 + $0xa] sm:$0x1] %vm1709, %v1696
    %1716 = vst.msk [vmem:[#allocation8 + $0xc] sm:$0x1] %vm1709, %v1698
    %1717 = vst.msk [vmem:[#allocation8 + $0xe] sm:$0x1] %vm1709, %v1700
    %v1719 = vcombine.high %v1648, %v1648
    %v1721 = vunpack.c.l.s4 1966171168
    %v1722 = vunpack.c.0.s8 %v1721
    %v1723 = vlaneseq
    %v1724 = vshrl.u32 %v1723, 7
    %v1725 = vsub.s32 %v1722, %v1724
    %v1726 = vrot.slane %v1648, %v1725
    %v1728 = vunpack.c.l.s4 1966171168
    %v1729 = vunpack.c.0.s8 %v1728
    %v1730 = vlaneseq
    %v1731 = vshrl.u32 %v1730, 7
    %v1732 = vsub.s32 %v1729, %v1731
    %v1733 = vrot.slane %v1719, %v1732
    %v1734 = vcombine.high %v1726, %v1726
    %v1735 = vcombine.high %v1733, %v1733
    %v1737 = vunpack.c.l.s4 1966171168
    %v1738 = vunpack.c.0.s8 %v1737
    %v1739 = vlaneseq
    %v1740 = vshrl.u32 %v1739, 7
    %v1741 = vsub.s32 %v1738, %v1740
    %v1742 = vrot.slane %v1726, %v1741
    %v1744 = vunpack.c.l.s4 1966171168
    %v1745 = vunpack.c.0.s8 %v1744
    %v1746 = vlaneseq
    %v1747 = vshrl.u32 %v1746, 7
    %v1748 = vsub.s32 %v1745, %v1747
    %v1749 = vrot.slane %v1733, %v1748
    %v1751 = vunpack.c.l.s4 1966171168
    %v1752 = vunpack.c.0.s8 %v1751
    %v1753 = vlaneseq
    %v1754 = vshrl.u32 %v1753, 7
    %v1755 = vsub.s32 %v1752, %v1754
    %v1756 = vrot.slane %v1734, %v1755
    %v1758 = vunpack.c.l.s4 1966171168
    %v1759 = vunpack.c.0.s8 %v1758
    %v1760 = vlaneseq
    %v1761 = vshrl.u32 %v1760, 7
    %v1762 = vsub.s32 %v1759, %v1761
    %v1763 = vrot.slane %v1735, %v1762
    %v1764 = vcombine.high %v1742, %v1742
    %v1765 = vcombine.high %v1749, %v1749
    %v1766 = vcombine.high %v1756, %v1756
    %v1767 = vcombine.high %v1763, %v1763
    %1776 = vst.msk [vmem:[#allocation8 + $0x1] sm:$0x1] %vm1709, %v1742
    %1777 = vst.msk [vmem:[#allocation8 + $0x3] sm:$0x1] %vm1709, %v1756
    %1778 = vst.msk [vmem:[#allocation8 + $0x5] sm:$0x1] %vm1709, %v1764
    %1779 = vst.msk [vmem:[#allocation8 + $0x7] sm:$0x1] %vm1709, %v1766
    %1780 = vst.msk [vmem:[#allocation8 + $0x9] sm:$0x1] %vm1709, %v1749
    %1781 = vst.msk [vmem:[#allocation8 + $0xb] sm:$0x1] %vm1709, %v1763
    %1782 = vst.msk [vmem:[#allocation8 + $0xd] sm:$0x1] %vm1709, %v1765
    %1783 = vst.msk [vmem:[#allocation8 + $0xf] sm:$0x1] %vm1709, %v1767
    // Predicated region
    $region34: #{tpu_custom_call.1} parent=1 // pred_check
      _
    $region35: #{tpu_custom_call.1} parent=1 // pred_check_branch
      %1785 = sbr.rel (0) target = $region37
    $region36: #{tpu_custom_call.1} parent=1 // pred_region
      %s1787 = ssub.s32 256, 256
      %1788 = vsyncadd [#allocation4], %s1787
      %s1789 = sshll.u32 [#allocation8], 4
      %s1790 = int_to_ptr.vmem [resolvable:$true] %s1789
      %1795 = dma.vmem_to_hbm [thread:$0]  %s1790, 256, %s5, [#allocation4], 32, 32, 2
    $region37: #{tpu_custom_call.1} parent=1 // pred_fallthru
      _
    // Predicated region
    $region38: #{tpu_custom_call.1} parent=1 // pred_check
      _
    $region39: #{tpu_custom_call.1} parent=1 // pred_check_branch
      %1797 = sbr.rel (0) target = $region41
    $region40: #{tpu_custom_call.1} parent=1 // pred_region
      %1798 = dma.done [#allocation4], 256
    $region41: #{tpu_custom_call.1} parent=1 // pred_fallthru
      _
    %1799 = vsyncpa [#allocation3], 1
    %1800 = vsyncpa [#allocation6], 1
    %1801 = vsyncpa [#allocation4], 1

</llo_original>
